<compile_context>
chip_gen: v7x
topology: tpu7x:2x2x1
jax: 0.10.0
libtpu: 0.0.40
codegen_flags: <defaults>
</compile_context>

<pallas_src>
import functools

import jax
import jax.numpy as jnp
from jax.experimental import pallas as pl
from jax.experimental.pallas import tpu as pltpu  # noqa: F401  (TPU backend import)

# ----------------------------- configuration -----------------------------
VOCAB       = 64               # token vocabulary
NUM_CLASSES = 64               # head output width
DIM         = 32
N_HEADS     = 4
HEAD_DIM    = DIM // N_HEADS
FFN_DIM     = 64
MAX_LEN     = 16
BATCH       = 2
SEQ         = 8
BS          = BATCH * SEQ
LANE        = 128              # lane-dense padded width for the head output
EPS         = 1e-5


# ----------------------------- fused Pallas kernel -----------------------------
def _fused_forward_kernel(ids_ref, emb_ref, pos_ref,
                          wqkv_ref, bqkv_ref, wo_ref, bo_ref,
                          ln1g_ref, ln1b_ref,
                          w1_ref, b1_ref, w2_ref, b2_ref,
                          ln2g_ref, ln2b_ref,
                          wh_ref, bh_ref,
                          out_ref):
    f32 = jnp.float32
    bf16 = jnp.bfloat16

    def dot_bf16(a, b):
        # bf16 operands feed the MXU natively on v6e/v7x; f32 accumulation.
        return jnp.dot(a.astype(bf16), b.astype(bf16), preferred_element_type=f32)

    def layer_norm(x, g, b):
        # keep reduction / normalization math in f32 on the VPU (v5e-safe)
        mean = jnp.mean(x, axis=-1, keepdims=True)
        var = jnp.mean((x - mean) ** 2, axis=-1, keepdims=True)
        return (x - mean) * jax.lax.rsqrt(var + EPS) * g + b

    # ---- embedding: exact gather via one-hot matmul (stays on the MXU) ----
    ids = ids_ref[...]                                                  # (BS, 1) i32
    iota_v = jax.lax.broadcasted_iota(jnp.int32, (BS, VOCAB), 1)
    onehot = (ids == iota_v).astype(f32)                                # (BS, V)
    tok = jnp.dot(onehot, emb_ref[...], preferred_element_type=f32)     # (BS, D)
    x = tok * jnp.float32(DIM ** 0.5) + pos_ref[...]                    # (BS, D)

    # ---- self-attention: fused QKV matmul, all B*H heads in one block ----
    qkv = dot_bf16(x, wqkv_ref[...]) + bqkv_ref[...]                    # (BS, 3D)
    scale = jnp.float32(1.0 / (HEAD_DIM ** 0.5))
    batch_rows = []
    for b in range(BATCH):
        r0 = b * SEQ
        head_outs = []
        for h in range(N_HEADS):
            c = h * HEAD_DIM
            q = qkv[r0:r0 + SEQ, c:c + HEAD_DIM]                        # (S, Dh)
            k = qkv[r0:r0 + SEQ, DIM + c:DIM + c + HEAD_DIM]            # (S, Dh)
            v = qkv[r0:r0 + SEQ, 2 * DIM + c:2 * DIM + c + HEAD_DIM]    # (S, Dh)
            s = jnp.dot(q, k.T, preferred_element_type=f32) * scale     # (S, S)
            m = jnp.max(s, axis=-1, keepdims=True)
            p = jnp.exp(s - m)
            p = p * pl.reciprocal(jnp.sum(p, axis=-1, keepdims=True), approx=True)
            head_outs.append(jnp.dot(p, v, preferred_element_type=f32)) # (S, Dh)
        batch_rows.append(jnp.concatenate(head_outs, axis=-1))          # (S, D)
    attn = jnp.concatenate(batch_rows, axis=0)                          # (BS, D)
    attn = dot_bf16(attn, wo_ref[...]) + bo_ref[...]

    # ---- post-LN residual blocks ----
    x = layer_norm(x + attn, ln1g_ref[...], ln1b_ref[...])
    h = jnp.maximum(dot_bf16(x, w1_ref[...]) + b1_ref[...], 0.0)        # FFN + fused ReLU
    x = layer_norm(x + dot_bf16(h, w2_ref[...]) + b2_ref[...],
                   ln2g_ref[...], ln2b_ref[...])

    # ---- head: lane-dense (BS, 128) padded logits, unmasked full-lane store ----
    out_ref[...] = dot_bf16(x, wh_ref[...]) + bh_ref[...]


# ----------------------------- wrapper -----------------------------
def encoder_with_head(token_ids, params):
    """token_ids: (B, S) int32 -> (logits (B, S, NUM_CLASSES), additional_losses {})."""
    B, S = token_ids.shape
    ids2d = token_ids.reshape(B * S, 1).astype(jnp.int32)

    # Param plumbing below operates on compile-time-constant params (bound via
    # functools.partial before jit), so it is constant-folded off the hot path.
    pos = jnp.tile(params["pos"][:S], (B, 1))                                # (BS, D)
    a = params["attn"]
    wqkv = jnp.concatenate([a["wq"], a["wk"], a["wv"]], axis=1)              # (D, 3D)
    bqkv = jnp.concatenate([a["bq"], a["bk"], a["bv"]]).reshape(1, 3 * DIM)
    f = params["ffn"]
    # head weight pre-padded to a lane-dense 128-wide slab (zeros beyond NUM_CLASSES)
    wh = jnp.zeros((DIM, LANE), jnp.float32).at[:, :NUM_CLASSES].set(params["head_w"])
    bh = jnp.zeros((1, LANE), jnp.float32).at[:, :NUM_CLASSES].set(params["head_b"])

    operands = (
        ids2d,
        params["emb"],
        pos,
        wqkv, bqkv,
        a["wo"], a["bo"].reshape(1, DIM),
        params["ln1_g"].reshape(1, DIM), params["ln1_b"].reshape(1, DIM),
        f["w1"], f["b1"].reshape(1, FFN_DIM),
        f["w2"], f["b2"].reshape(1, DIM),
        params["ln2_g"].reshape(1, DIM), params["ln2_b"].reshape(1, DIM),
        wh, bh,
    )
    in_specs = [pl.BlockSpec(o.shape, lambda: (0, 0)) for o in operands]

    padded = pl.pallas_call(
        _fused_forward_kernel,
        out_shape=jax.ShapeDtypeStruct((B * S, LANE), jnp.float32),
        in_specs=in_specs,
        out_specs=pl.BlockSpec((B * S, LANE), lambda: (0, 0)),
    )(*operands)

    logits = padded.reshape(B, S, LANE)[:, :, :NUM_CLASSES]
    # encoder.additional_losses() -> this minimal encoder has no auxiliary losses
    return logits, {}


# ----------------------------- param init -----------------------------
def init_params(key):
    ks = jax.random.split(key, 10)
    mk = lambda k, shp: jax.random.normal(k, shp, jnp.float32) * 0.02
    return {
        "emb": mk(ks[0], (VOCAB, DIM)),
        "pos": mk(ks[1], (MAX_LEN, DIM)),
        "attn": {
            "wq": mk(ks[2], (DIM, DIM)), "bq": jnp.zeros((DIM,), jnp.float32),
            "wk": mk(ks[3], (DIM, DIM)), "bk": jnp.zeros((DIM,), jnp.float32),
            "wv": mk(ks[4], (DIM, DIM)), "bv": jnp.zeros((DIM,), jnp.float32),
            "wo": mk(ks[5], (DIM, DIM)), "bo": jnp.zeros((DIM,), jnp.float32),
        },
        "ffn": {
            "w1": mk(ks[6], (DIM, FFN_DIM)), "b1": jnp.zeros((FFN_DIM,), jnp.float32),
            "w2": mk(ks[7], (FFN_DIM, DIM)), "b2": jnp.zeros((DIM,), jnp.float32),
        },
        "ln1_g": jnp.ones((DIM,), jnp.float32), "ln1_b": jnp.zeros((DIM,), jnp.float32),
        "ln2_g": jnp.ones((DIM,), jnp.float32), "ln2_b": jnp.zeros((DIM,), jnp.float32),
        "head_w": mk(ks[8], (DIM, NUM_CLASSES)),
        "head_b": jnp.zeros((NUM_CLASSES,), jnp.float32),
    }


# ----------------------------- main -----------------------------
if __name__ == "__main__":
    key = jax.random.PRNGKey(0)
    k_p, k_ids = jax.random.split(key)
    params = init_params(k_p)

    token_ids = jax.random.randint(k_ids, (BATCH, SEQ), 0, VOCAB, dtype=jnp.int32)

    fwd = jax.jit(functools.partial(encoder_with_head, params=params))
    logits, aux_losses = fwd(token_ids)
    jax.block_until_ready(logits)

    assert logits.shape == (BATCH, SEQ, NUM_CLASSES)
    assert logits.dtype == jnp.float32
    assert bool(jnp.all(jnp.isfinite(logits)))
    assert aux_losses == {}
    print("KERNEL_OK")
</pallas_src>

<mosaic_0001>
module attributes {stable_mosaic.version = 11 : i64} {
  func.func @_fused_forward_kernel(%arg0: memref<16x1xi32, #tpu.memory_space<vmem>>, %arg1: memref<64x32xf32, #tpu.memory_space<vmem>>, %arg2: memref<16x32xf32, #tpu.memory_space<vmem>>, %arg3: memref<32x96xf32, #tpu.memory_space<vmem>>, %arg4: memref<1x96xf32, #tpu.memory_space<vmem>>, %arg5: memref<32x32xf32, #tpu.memory_space<vmem>>, %arg6: memref<1x32xf32, #tpu.memory_space<vmem>>, %arg7: memref<1x32xf32, #tpu.memory_space<vmem>>, %arg8: memref<1x32xf32, #tpu.memory_space<vmem>>, %arg9: memref<32x64xf32, #tpu.memory_space<vmem>>, %arg10: memref<1x64xf32, #tpu.memory_space<vmem>>, %arg11: memref<64x32xf32, #tpu.memory_space<vmem>>, %arg12: memref<1x32xf32, #tpu.memory_space<vmem>>, %arg13: memref<1x32xf32, #tpu.memory_space<vmem>>, %arg14: memref<1x32xf32, #tpu.memory_space<vmem>>, %arg15: memref<32x128xf32, #tpu.memory_space<vmem>>, %arg16: memref<1x128xf32, #tpu.memory_space<vmem>>, %arg17: memref<16x128xf32, #tpu.memory_space<vmem>>) attributes {dimension_semantics = [], scalar_prefetch = 0 : i64, scratch_operands = 0 : i64, tpu.core_type = #tpu.core_type<tc>} {
    %c0 = arith.constant 0 : index
    %c0_0 = arith.constant 0 : index
    %0 = vector.load %arg0[%c0, %c0_0] : memref<16x1xi32, #tpu.memory_space<vmem>>, vector<16x1xi32>
    %1 = tpu.iota {dimensions = array<i32: 1>} : vector<16x64xi32>
    %2 = vector.broadcast %0 : vector<16x1xi32> to vector<16x64xi32>
    %3 = arith.cmpi eq, %2, %1 : vector<16x64xi32>
    %4 = arith.extui %3 : vector<16x64xi1> to vector<16x64xi32>
    %5 = arith.sitofp %4 : vector<16x64xi32> to vector<16x64xf32>
    %c0_1 = arith.constant 0 : index
    %c0_2 = arith.constant 0 : index
    %6 = vector.load %arg1[%c0_1, %c0_2] : memref<64x32xf32, #tpu.memory_space<vmem>>, vector<64x32xf32>
    %cst = arith.constant dense<0.000000e+00> : vector<16x32xf32>
    %7 = tpu.matmul %5, %6, %cst {dimension_numbers = #tpu.dot_dimension_numbers<[1], [0], [0], [1], [0, 0, 1, 1], [], []>} : vector<16x64xf32>, vector<64x32xf32>, vector<16x32xf32> -> vector<16x32xf32>
    %cst_3 = arith.constant 5.65685415 : f32
    %8 = vector.broadcast %cst_3 : f32 to vector<16x32xf32>
    %9 = arith.mulf %7, %8 : vector<16x32xf32>
    %c0_4 = arith.constant 0 : index
    %c0_5 = arith.constant 0 : index
    %10 = vector.load %arg2[%c0_4, %c0_5] : memref<16x32xf32, #tpu.memory_space<vmem>>, vector<16x32xf32>
    %11 = arith.addf %9, %10 : vector<16x32xf32>
    %c0_6 = arith.constant 0 : index
    %c0_7 = arith.constant 0 : index
    %12 = vector.load %arg3[%c0_6, %c0_7] : memref<32x96xf32, #tpu.memory_space<vmem>>, vector<32x96xf32>
    %13 = arith.truncf %11 : vector<16x32xf32> to vector<16x32xbf16>
    %14 = arith.truncf %12 : vector<32x96xf32> to vector<32x96xbf16>
    %cst_8 = arith.constant dense<0.000000e+00> : vector<16x96xf32>
    %15 = tpu.matmul %13, %14, %cst_8 {dimension_numbers = #tpu.dot_dimension_numbers<[1], [0], [0], [1], [0, 0, 1, 1], [], []>} : vector<16x32xbf16>, vector<32x96xbf16>, vector<16x96xf32> -> vector<16x96xf32>
    %c0_9 = arith.constant 0 : index
    %c0_10 = arith.constant 0 : index
    %16 = vector.load %arg4[%c0_9, %c0_10] : memref<1x96xf32, #tpu.memory_space<vmem>>, vector<1x96xf32>
    %17 = vector.broadcast %16 : vector<1x96xf32> to vector<16x96xf32>
    %18 = arith.addf %15, %17 : vector<16x96xf32>
    %19 = vector.extract_strided_slice %18 {offsets = [0, 0], sizes = [8, 8], strides = [1, 1]} : vector<16x96xf32> to vector<8x8xf32>
    %20 = vector.extract_strided_slice %18 {offsets = [0, 32], sizes = [8, 8], strides = [1, 1]} : vector<16x96xf32> to vector<8x8xf32>
    %21 = vector.extract_strided_slice %18 {offsets = [0, 64], sizes = [8, 8], strides = [1, 1]} : vector<16x96xf32> to vector<8x8xf32>
    %22 = tpu.transpose %20, [1, 0] : vector<8x8xf32> -> vector<8x8xf32>
    %cst_11 = arith.constant dense<0.000000e+00> : vector<8x8xf32>
    %23 = tpu.matmul %19, %22, %cst_11 {dimension_numbers = #tpu.dot_dimension_numbers<[1], [0], [0], [1], [0, 0, 1, 1], [], []>} : vector<8x8xf32>, vector<8x8xf32>, vector<8x8xf32> -> vector<8x8xf32>
    %cst_12 = arith.constant 0.353553385 : f32
    %24 = vector.broadcast %cst_12 : f32 to vector<8x8xf32>
    %25 = arith.mulf %23, %24 : vector<8x8xf32>
    %cst_13 = arith.constant dense<0xFF800000> : vector<8xf32>
    %26 = vector.multi_reduction <maximumf>, %25, %cst_13 [1] : vector<8x8xf32> to vector<8xf32>
    %27 = vector.shape_cast %26 : vector<8xf32> to vector<8x1xf32>
    %28 = vector.broadcast %27 : vector<8x1xf32> to vector<8x8xf32>
    %29 = arith.subf %25, %28 : vector<8x8xf32>
    %30 = math.exp %29 : vector<8x8xf32>
    %cst_14 = arith.constant dense<0.000000e+00> : vector<8xf32>
    %31 = vector.multi_reduction <add>, %30, %cst_14 [1] : vector<8x8xf32> to vector<8xf32>
    %32 = vector.shape_cast %31 : vector<8xf32> to vector<8x1xf32>
    %33 = tpu.reciprocal %32 {approx = true} : vector<8x1xf32> -> vector<8x1xf32>
    %34 = vector.broadcast %33 : vector<8x1xf32> to vector<8x8xf32>
    %35 = arith.mulf %30, %34 : vector<8x8xf32>
    %cst_15 = arith.constant dense<0.000000e+00> : vector<8x8xf32>
    %36 = tpu.matmul %35, %21, %cst_15 {dimension_numbers = #tpu.dot_dimension_numbers<[1], [0], [0], [1], [0, 0, 1, 1], [], []>} : vector<8x8xf32>, vector<8x8xf32>, vector<8x8xf32> -> vector<8x8xf32>
    %37 = vector.extract_strided_slice %18 {offsets = [0, 8], sizes = [8, 8], strides = [1, 1]} : vector<16x96xf32> to vector<8x8xf32>
    %38 = vector.extract_strided_slice %18 {offsets = [0, 40], sizes = [8, 8], strides = [1, 1]} : vector<16x96xf32> to vector<8x8xf32>
    %39 = vector.extract_strided_slice %18 {offsets = [0, 72], sizes = [8, 8], strides = [1, 1]} : vector<16x96xf32> to vector<8x8xf32>
    %40 = tpu.transpose %38, [1, 0] : vector<8x8xf32> -> vector<8x8xf32>
    %cst_16 = arith.constant dense<0.000000e+00> : vector<8x8xf32>
    %41 = tpu.matmul %37, %40, %cst_16 {dimension_numbers = #tpu.dot_dimension_numbers<[1], [0], [0], [1], [0, 0, 1, 1], [], []>} : vector<8x8xf32>, vector<8x8xf32>, vector<8x8xf32> -> vector<8x8xf32>
    %cst_17 = arith.constant 0.353553385 : f32
    %42 = vector.broadcast %cst_17 : f32 to vector<8x8xf32>
    %43 = arith.mulf %41, %42 : vector<8x8xf32>
    %cst_18 = arith.constant dense<0xFF800000> : vector<8xf32>
    %44 = vector.multi_reduction <maximumf>, %43, %cst_18 [1] : vector<8x8xf32> to vector<8xf32>
    %45 = vector.shape_cast %44 : vector<8xf32> to vector<8x1xf32>
    %46 = vector.broadcast %45 : vector<8x1xf32> to vector<8x8xf32>
    %47 = arith.subf %43, %46 : vector<8x8xf32>
    %48 = math.exp %47 : vector<8x8xf32>
    %cst_19 = arith.constant dense<0.000000e+00> : vector<8xf32>
    %49 = vector.multi_reduction <add>, %48, %cst_19 [1] : vector<8x8xf32> to vector<8xf32>
    %50 = vector.shape_cast %49 : vector<8xf32> to vector<8x1xf32>
    %51 = tpu.reciprocal %50 {approx = true} : vector<8x1xf32> -> vector<8x1xf32>
    %52 = vector.broadcast %51 : vector<8x1xf32> to vector<8x8xf32>
    %53 = arith.mulf %48, %52 : vector<8x8xf32>
    %cst_20 = arith.constant dense<0.000000e+00> : vector<8x8xf32>
    %54 = tpu.matmul %53, %39, %cst_20 {dimension_numbers = #tpu.dot_dimension_numbers<[1], [0], [0], [1], [0, 0, 1, 1], [], []>} : vector<8x8xf32>, vector<8x8xf32>, vector<8x8xf32> -> vector<8x8xf32>
    %55 = vector.extract_strided_slice %18 {offsets = [0, 16], sizes = [8, 8], strides = [1, 1]} : vector<16x96xf32> to vector<8x8xf32>
    %56 = vector.extract_strided_slice %18 {offsets = [0, 48], sizes = [8, 8], strides = [1, 1]} : vector<16x96xf32> to vector<8x8xf32>
    %57 = vector.extract_strided_slice %18 {offsets = [0, 80], sizes = [8, 8], strides = [1, 1]} : vector<16x96xf32> to vector<8x8xf32>
    %58 = tpu.transpose %56, [1, 0] : vector<8x8xf32> -> vector<8x8xf32>
    %cst_21 = arith.constant dense<0.000000e+00> : vector<8x8xf32>
    %59 = tpu.matmul %55, %58, %cst_21 {dimension_numbers = #tpu.dot_dimension_numbers<[1], [0], [0], [1], [0, 0, 1, 1], [], []>} : vector<8x8xf32>, vector<8x8xf32>, vector<8x8xf32> -> vector<8x8xf32>
    %cst_22 = arith.constant 0.353553385 : f32
    %60 = vector.broadcast %cst_22 : f32 to vector<8x8xf32>
    %61 = arith.mulf %59, %60 : vector<8x8xf32>
    %cst_23 = arith.constant dense<0xFF800000> : vector<8xf32>
    %62 = vector.multi_reduction <maximumf>, %61, %cst_23 [1] : vector<8x8xf32> to vector<8xf32>
    %63 = vector.shape_cast %62 : vector<8xf32> to vector<8x1xf32>
    %64 = vector.broadcast %63 : vector<8x1xf32> to vector<8x8xf32>
    %65 = arith.subf %61, %64 : vector<8x8xf32>
    %66 = math.exp %65 : vector<8x8xf32>
    %cst_24 = arith.constant dense<0.000000e+00> : vector<8xf32>
    %67 = vector.multi_reduction <add>, %66, %cst_24 [1] : vector<8x8xf32> to vector<8xf32>
    %68 = vector.shape_cast %67 : vector<8xf32> to vector<8x1xf32>
    %69 = tpu.reciprocal %68 {approx = true} : vector<8x1xf32> -> vector<8x1xf32>
    %70 = vector.broadcast %69 : vector<8x1xf32> to vector<8x8xf32>
    %71 = arith.mulf %66, %70 : vector<8x8xf32>
    %cst_25 = arith.constant dense<0.000000e+00> : vector<8x8xf32>
    %72 = tpu.matmul %71, %57, %cst_25 {dimension_numbers = #tpu.dot_dimension_numbers<[1], [0], [0], [1], [0, 0, 1, 1], [], []>} : vector<8x8xf32>, vector<8x8xf32>, vector<8x8xf32> -> vector<8x8xf32>
    %73 = vector.extract_strided_slice %18 {offsets = [0, 24], sizes = [8, 8], strides = [1, 1]} : vector<16x96xf32> to vector<8x8xf32>
    %74 = vector.extract_strided_slice %18 {offsets = [0, 56], sizes = [8, 8], strides = [1, 1]} : vector<16x96xf32> to vector<8x8xf32>
    %75 = vector.extract_strided_slice %18 {offsets = [0, 88], sizes = [8, 8], strides = [1, 1]} : vector<16x96xf32> to vector<8x8xf32>
    %76 = tpu.transpose %74, [1, 0] : vector<8x8xf32> -> vector<8x8xf32>
    %cst_26 = arith.constant dense<0.000000e+00> : vector<8x8xf32>
    %77 = tpu.matmul %73, %76, %cst_26 {dimension_numbers = #tpu.dot_dimension_numbers<[1], [0], [0], [1], [0, 0, 1, 1], [], []>} : vector<8x8xf32>, vector<8x8xf32>, vector<8x8xf32> -> vector<8x8xf32>
    %cst_27 = arith.constant 0.353553385 : f32
    %78 = vector.broadcast %cst_27 : f32 to vector<8x8xf32>
    %79 = arith.mulf %77, %78 : vector<8x8xf32>
    %cst_28 = arith.constant dense<0xFF800000> : vector<8xf32>
    %80 = vector.multi_reduction <maximumf>, %79, %cst_28 [1] : vector<8x8xf32> to vector<8xf32>
    %81 = vector.shape_cast %80 : vector<8xf32> to vector<8x1xf32>
    %82 = vector.broadcast %81 : vector<8x1xf32> to vector<8x8xf32>
    %83 = arith.subf %79, %82 : vector<8x8xf32>
    %84 = math.exp %83 : vector<8x8xf32>
    %cst_29 = arith.constant dense<0.000000e+00> : vector<8xf32>
    %85 = vector.multi_reduction <add>, %84, %cst_29 [1] : vector<8x8xf32> to vector<8xf32>
    %86 = vector.shape_cast %85 : vector<8xf32> to vector<8x1xf32>
    %87 = tpu.reciprocal %86 {approx = true} : vector<8x1xf32> -> vector<8x1xf32>
    %88 = vector.broadcast %87 : vector<8x1xf32> to vector<8x8xf32>
    %89 = arith.mulf %84, %88 : vector<8x8xf32>
    %cst_30 = arith.constant dense<0.000000e+00> : vector<8x8xf32>
    %90 = tpu.matmul %89, %75, %cst_30 {dimension_numbers = #tpu.dot_dimension_numbers<[1], [0], [0], [1], [0, 0, 1, 1], [], []>} : vector<8x8xf32>, vector<8x8xf32>, vector<8x8xf32> -> vector<8x8xf32>
    %91 = tpu.concatenate %36, %54, %72, %90 in 1 : vector<8x8xf32>, vector<8x8xf32>, vector<8x8xf32>, vector<8x8xf32> -> vector<8x32xf32>
    %92 = vector.extract_strided_slice %18 {offsets = [8, 0], sizes = [8, 8], strides = [1, 1]} : vector<16x96xf32> to vector<8x8xf32>
    %93 = vector.extract_strided_slice %18 {offsets = [8, 32], sizes = [8, 8], strides = [1, 1]} : vector<16x96xf32> to vector<8x8xf32>
    %94 = vector.extract_strided_slice %18 {offsets = [8, 64], sizes = [8, 8], strides = [1, 1]} : vector<16x96xf32> to vector<8x8xf32>
    %95 = tpu.transpose %93, [1, 0] : vector<8x8xf32> -> vector<8x8xf32>
    %cst_31 = arith.constant dense<0.000000e+00> : vector<8x8xf32>
    %96 = tpu.matmul %92, %95, %cst_31 {dimension_numbers = #tpu.dot_dimension_numbers<[1], [0], [0], [1], [0, 0, 1, 1], [], []>} : vector<8x8xf32>, vector<8x8xf32>, vector<8x8xf32> -> vector<8x8xf32>
    %cst_32 = arith.constant 0.353553385 : f32
    %97 = vector.broadcast %cst_32 : f32 to vector<8x8xf32>
    %98 = arith.mulf %96, %97 : vector<8x8xf32>
    %cst_33 = arith.constant dense<0xFF800000> : vector<8xf32>
    %99 = vector.multi_reduction <maximumf>, %98, %cst_33 [1] : vector<8x8xf32> to vector<8xf32>
    %100 = vector.shape_cast %99 : vector<8xf32> to vector<8x1xf32>
    %101 = vector.broadcast %100 : vector<8x1xf32> to vector<8x8xf32>
    %102 = arith.subf %98, %101 : vector<8x8xf32>
    %103 = math.exp %102 : vector<8x8xf32>
    %cst_34 = arith.constant dense<0.000000e+00> : vector<8xf32>
    %104 = vector.multi_reduction <add>, %103, %cst_34 [1] : vector<8x8xf32> to vector<8xf32>
    %105 = vector.shape_cast %104 : vector<8xf32> to vector<8x1xf32>
    %106 = tpu.reciprocal %105 {approx = true} : vector<8x1xf32> -> vector<8x1xf32>
    %107 = vector.broadcast %106 : vector<8x1xf32> to vector<8x8xf32>
    %108 = arith.mulf %103, %107 : vector<8x8xf32>
    %cst_35 = arith.constant dense<0.000000e+00> : vector<8x8xf32>
    %109 = tpu.matmul %108, %94, %cst_35 {dimension_numbers = #tpu.dot_dimension_numbers<[1], [0], [0], [1], [0, 0, 1, 1], [], []>} : vector<8x8xf32>, vector<8x8xf32>, vector<8x8xf32> -> vector<8x8xf32>
    %110 = vector.extract_strided_slice %18 {offsets = [8, 8], sizes = [8, 8], strides = [1, 1]} : vector<16x96xf32> to vector<8x8xf32>
    %111 = vector.extract_strided_slice %18 {offsets = [8, 40], sizes = [8, 8], strides = [1, 1]} : vector<16x96xf32> to vector<8x8xf32>
    %112 = vector.extract_strided_slice %18 {offsets = [8, 72], sizes = [8, 8], strides = [1, 1]} : vector<16x96xf32> to vector<8x8xf32>
    %113 = tpu.transpose %111, [1, 0] : vector<8x8xf32> -> vector<8x8xf32>
    %cst_36 = arith.constant dense<0.000000e+00> : vector<8x8xf32>
    %114 = tpu.matmul %110, %113, %cst_36 {dimension_numbers = #tpu.dot_dimension_numbers<[1], [0], [0], [1], [0, 0, 1, 1], [], []>} : vector<8x8xf32>, vector<8x8xf32>, vector<8x8xf32> -> vector<8x8xf32>
    %cst_37 = arith.constant 0.353553385 : f32
    %115 = vector.broadcast %cst_37 : f32 to vector<8x8xf32>
    %116 = arith.mulf %114, %115 : vector<8x8xf32>
    %cst_38 = arith.constant dense<0xFF800000> : vector<8xf32>
    %117 = vector.multi_reduction <maximumf>, %116, %cst_38 [1] : vector<8x8xf32> to vector<8xf32>
    %118 = vector.shape_cast %117 : vector<8xf32> to vector<8x1xf32>
    %119 = vector.broadcast %118 : vector<8x1xf32> to vector<8x8xf32>
    %120 = arith.subf %116, %119 : vector<8x8xf32>
    %121 = math.exp %120 : vector<8x8xf32>
    %cst_39 = arith.constant dense<0.000000e+00> : vector<8xf32>
    %122 = vector.multi_reduction <add>, %121, %cst_39 [1] : vector<8x8xf32> to vector<8xf32>
    %123 = vector.shape_cast %122 : vector<8xf32> to vector<8x1xf32>
    %124 = tpu.reciprocal %123 {approx = true} : vector<8x1xf32> -> vector<8x1xf32>
    %125 = vector.broadcast %124 : vector<8x1xf32> to vector<8x8xf32>
    %126 = arith.mulf %121, %125 : vector<8x8xf32>
    %cst_40 = arith.constant dense<0.000000e+00> : vector<8x8xf32>
    %127 = tpu.matmul %126, %112, %cst_40 {dimension_numbers = #tpu.dot_dimension_numbers<[1], [0], [0], [1], [0, 0, 1, 1], [], []>} : vector<8x8xf32>, vector<8x8xf32>, vector<8x8xf32> -> vector<8x8xf32>
    %128 = vector.extract_strided_slice %18 {offsets = [8, 16], sizes = [8, 8], strides = [1, 1]} : vector<16x96xf32> to vector<8x8xf32>
    %129 = vector.extract_strided_slice %18 {offsets = [8, 48], sizes = [8, 8], strides = [1, 1]} : vector<16x96xf32> to vector<8x8xf32>
    %130 = vector.extract_strided_slice %18 {offsets = [8, 80], sizes = [8, 8], strides = [1, 1]} : vector<16x96xf32> to vector<8x8xf32>
    %131 = tpu.transpose %129, [1, 0] : vector<8x8xf32> -> vector<8x8xf32>
    %cst_41 = arith.constant dense<0.000000e+00> : vector<8x8xf32>
    %132 = tpu.matmul %128, %131, %cst_41 {dimension_numbers = #tpu.dot_dimension_numbers<[1], [0], [0], [1], [0, 0, 1, 1], [], []>} : vector<8x8xf32>, vector<8x8xf32>, vector<8x8xf32> -> vector<8x8xf32>
    %cst_42 = arith.constant 0.353553385 : f32
    %133 = vector.broadcast %cst_42 : f32 to vector<8x8xf32>
    %134 = arith.mulf %132, %133 : vector<8x8xf32>
    %cst_43 = arith.constant dense<0xFF800000> : vector<8xf32>
    %135 = vector.multi_reduction <maximumf>, %134, %cst_43 [1] : vector<8x8xf32> to vector<8xf32>
    %136 = vector.shape_cast %135 : vector<8xf32> to vector<8x1xf32>
    %137 = vector.broadcast %136 : vector<8x1xf32> to vector<8x8xf32>
    %138 = arith.subf %134, %137 : vector<8x8xf32>
    %139 = math.exp %138 : vector<8x8xf32>
    %cst_44 = arith.constant dense<0.000000e+00> : vector<8xf32>
    %140 = vector.multi_reduction <add>, %139, %cst_44 [1] : vector<8x8xf32> to vector<8xf32>
    %141 = vector.shape_cast %140 : vector<8xf32> to vector<8x1xf32>
    %142 = tpu.reciprocal %141 {approx = true} : vector<8x1xf32> -> vector<8x1xf32>
    %143 = vector.broadcast %142 : vector<8x1xf32> to vector<8x8xf32>
    %144 = arith.mulf %139, %143 : vector<8x8xf32>
    %cst_45 = arith.constant dense<0.000000e+00> : vector<8x8xf32>
    %145 = tpu.matmul %144, %130, %cst_45 {dimension_numbers = #tpu.dot_dimension_numbers<[1], [0], [0], [1], [0, 0, 1, 1], [], []>} : vector<8x8xf32>, vector<8x8xf32>, vector<8x8xf32> -> vector<8x8xf32>
    %146 = vector.extract_strided_slice %18 {offsets = [8, 24], sizes = [8, 8], strides = [1, 1]} : vector<16x96xf32> to vector<8x8xf32>
    %147 = vector.extract_strided_slice %18 {offsets = [8, 56], sizes = [8, 8], strides = [1, 1]} : vector<16x96xf32> to vector<8x8xf32>
    %148 = vector.extract_strided_slice %18 {offsets = [8, 88], sizes = [8, 8], strides = [1, 1]} : vector<16x96xf32> to vector<8x8xf32>
    %149 = tpu.transpose %147, [1, 0] : vector<8x8xf32> -> vector<8x8xf32>
    %cst_46 = arith.constant dense<0.000000e+00> : vector<8x8xf32>
    %150 = tpu.matmul %146, %149, %cst_46 {dimension_numbers = #tpu.dot_dimension_numbers<[1], [0], [0], [1], [0, 0, 1, 1], [], []>} : vector<8x8xf32>, vector<8x8xf32>, vector<8x8xf32> -> vector<8x8xf32>
    %cst_47 = arith.constant 0.353553385 : f32
    %151 = vector.broadcast %cst_47 : f32 to vector<8x8xf32>
    %152 = arith.mulf %150, %151 : vector<8x8xf32>
    %cst_48 = arith.constant dense<0xFF800000> : vector<8xf32>
    %153 = vector.multi_reduction <maximumf>, %152, %cst_48 [1] : vector<8x8xf32> to vector<8xf32>
    %154 = vector.shape_cast %153 : vector<8xf32> to vector<8x1xf32>
    %155 = vector.broadcast %154 : vector<8x1xf32> to vector<8x8xf32>
    %156 = arith.subf %152, %155 : vector<8x8xf32>
    %157 = math.exp %156 : vector<8x8xf32>
    %cst_49 = arith.constant dense<0.000000e+00> : vector<8xf32>
    %158 = vector.multi_reduction <add>, %157, %cst_49 [1] : vector<8x8xf32> to vector<8xf32>
    %159 = vector.shape_cast %158 : vector<8xf32> to vector<8x1xf32>
    %160 = tpu.reciprocal %159 {approx = true} : vector<8x1xf32> -> vector<8x1xf32>
    %161 = vector.broadcast %160 : vector<8x1xf32> to vector<8x8xf32>
    %162 = arith.mulf %157, %161 : vector<8x8xf32>
    %cst_50 = arith.constant dense<0.000000e+00> : vector<8x8xf32>
    %163 = tpu.matmul %162, %148, %cst_50 {dimension_numbers = #tpu.dot_dimension_numbers<[1], [0], [0], [1], [0, 0, 1, 1], [], []>} : vector<8x8xf32>, vector<8x8xf32>, vector<8x8xf32> -> vector<8x8xf32>
    %164 = tpu.concatenate %109, %127, %145, %163 in 1 : vector<8x8xf32>, vector<8x8xf32>, vector<8x8xf32>, vector<8x8xf32> -> vector<8x32xf32>
    %165 = tpu.concatenate %91, %164 in 0 : vector<8x32xf32>, vector<8x32xf32> -> vector<16x32xf32>
    %c0_51 = arith.constant 0 : index
    %c0_52 = arith.constant 0 : index
    %166 = vector.load %arg5[%c0_51, %c0_52] : memref<32x32xf32, #tpu.memory_space<vmem>>, vector<32x32xf32>
    %167 = arith.truncf %165 : vector<16x32xf32> to vector<16x32xbf16>
    %168 = arith.truncf %166 : vector<32x32xf32> to vector<32x32xbf16>
    %cst_53 = arith.constant dense<0.000000e+00> : vector<16x32xf32>
    %169 = tpu.matmul %167, %168, %cst_53 {dimension_numbers = #tpu.dot_dimension_numbers<[1], [0], [0], [1], [0, 0, 1, 1], [], []>} : vector<16x32xbf16>, vector<32x32xbf16>, vector<16x32xf32> -> vector<16x32xf32>
    %c0_54 = arith.constant 0 : index
    %c0_55 = arith.constant 0 : index
    %170 = vector.load %arg6[%c0_54, %c0_55] : memref<1x32xf32, #tpu.memory_space<vmem>>, vector<1x32xf32>
    %171 = vector.broadcast %170 : vector<1x32xf32> to vector<16x32xf32>
    %172 = arith.addf %169, %171 : vector<16x32xf32>
    %173 = arith.addf %11, %172 : vector<16x32xf32>
    %c0_56 = arith.constant 0 : index
    %c0_57 = arith.constant 0 : index
    %174 = vector.load %arg7[%c0_56, %c0_57] : memref<1x32xf32, #tpu.memory_space<vmem>>, vector<1x32xf32>
    %c0_58 = arith.constant 0 : index
    %c0_59 = arith.constant 0 : index
    %175 = vector.load %arg8[%c0_58, %c0_59] : memref<1x32xf32, #tpu.memory_space<vmem>>, vector<1x32xf32>
    %cst_60 = arith.constant dense<0.000000e+00> : vector<16xf32>
    %176 = vector.multi_reduction <add>, %173, %cst_60 [1] : vector<16x32xf32> to vector<16xf32>
    %177 = vector.shape_cast %176 : vector<16xf32> to vector<16x1xf32>
    %cst_61 = arith.constant 3.200000e+01 : f32
    %178 = vector.broadcast %cst_61 : f32 to vector<16x1xf32>
    %179 = arith.divf %177, %178 : vector<16x1xf32>
    %180 = vector.broadcast %179 : vector<16x1xf32> to vector<16x32xf32>
    %181 = arith.subf %173, %180 : vector<16x32xf32>
    %182 = arith.mulf %181, %181 : vector<16x32xf32>
    %cst_62 = arith.constant dense<0.000000e+00> : vector<16xf32>
    %183 = vector.multi_reduction <add>, %182, %cst_62 [1] : vector<16x32xf32> to vector<16xf32>
    %184 = vector.shape_cast %183 : vector<16xf32> to vector<16x1xf32>
    %cst_63 = arith.constant 3.200000e+01 : f32
    %185 = vector.broadcast %cst_63 : f32 to vector<16x1xf32>
    %186 = arith.divf %184, %185 : vector<16x1xf32>
    %187 = vector.broadcast %179 : vector<16x1xf32> to vector<16x32xf32>
    %188 = arith.subf %173, %187 : vector<16x32xf32>
    %cst_64 = arith.constant 9.99999974E-6 : f32
    %189 = vector.broadcast %cst_64 : f32 to vector<16x1xf32>
    %190 = arith.addf %186, %189 : vector<16x1xf32>
    %191 = math.rsqrt %190 : vector<16x1xf32>
    %192 = vector.broadcast %191 : vector<16x1xf32> to vector<16x32xf32>
    %193 = arith.mulf %188, %192 : vector<16x32xf32>
    %194 = vector.broadcast %174 : vector<1x32xf32> to vector<16x32xf32>
    %195 = arith.mulf %193, %194 : vector<16x32xf32>
    %196 = vector.broadcast %175 : vector<1x32xf32> to vector<16x32xf32>
    %197 = arith.addf %195, %196 : vector<16x32xf32>
    %c0_65 = arith.constant 0 : index
    %c0_66 = arith.constant 0 : index
    %198 = vector.load %arg9[%c0_65, %c0_66] : memref<32x64xf32, #tpu.memory_space<vmem>>, vector<32x64xf32>
    %199 = arith.truncf %197 : vector<16x32xf32> to vector<16x32xbf16>
    %200 = arith.truncf %198 : vector<32x64xf32> to vector<32x64xbf16>
    %cst_67 = arith.constant dense<0.000000e+00> : vector<16x64xf32>
    %201 = tpu.matmul %199, %200, %cst_67 {dimension_numbers = #tpu.dot_dimension_numbers<[1], [0], [0], [1], [0, 0, 1, 1], [], []>} : vector<16x32xbf16>, vector<32x64xbf16>, vector<16x64xf32> -> vector<16x64xf32>
    %c0_68 = arith.constant 0 : index
    %c0_69 = arith.constant 0 : index
    %202 = vector.load %arg10[%c0_68, %c0_69] : memref<1x64xf32, #tpu.memory_space<vmem>>, vector<1x64xf32>
    %203 = vector.broadcast %202 : vector<1x64xf32> to vector<16x64xf32>
    %204 = arith.addf %201, %203 : vector<16x64xf32>
    %cst_70 = arith.constant 0.000000e+00 : f32
    %205 = vector.broadcast %cst_70 : f32 to vector<16x64xf32>
    %206 = arith.maximumf %204, %205 : vector<16x64xf32>
    %c0_71 = arith.constant 0 : index
    %c0_72 = arith.constant 0 : index
    %207 = vector.load %arg11[%c0_71, %c0_72] : memref<64x32xf32, #tpu.memory_space<vmem>>, vector<64x32xf32>
    %208 = arith.truncf %206 : vector<16x64xf32> to vector<16x64xbf16>
    %209 = arith.truncf %207 : vector<64x32xf32> to vector<64x32xbf16>
    %cst_73 = arith.constant dense<0.000000e+00> : vector<16x32xf32>
    %210 = tpu.matmul %208, %209, %cst_73 {dimension_numbers = #tpu.dot_dimension_numbers<[1], [0], [0], [1], [0, 0, 1, 1], [], []>} : vector<16x64xbf16>, vector<64x32xbf16>, vector<16x32xf32> -> vector<16x32xf32>
    %211 = arith.addf %197, %210 : vector<16x32xf32>
    %c0_74 = arith.constant 0 : index
    %c0_75 = arith.constant 0 : index
    %212 = vector.load %arg12[%c0_74, %c0_75] : memref<1x32xf32, #tpu.memory_space<vmem>>, vector<1x32xf32>
    %213 = vector.broadcast %212 : vector<1x32xf32> to vector<16x32xf32>
    %214 = arith.addf %211, %213 : vector<16x32xf32>
    %c0_76 = arith.constant 0 : index
    %c0_77 = arith.constant 0 : index
    %215 = vector.load %arg13[%c0_76, %c0_77] : memref<1x32xf32, #tpu.memory_space<vmem>>, vector<1x32xf32>
    %c0_78 = arith.constant 0 : index
    %c0_79 = arith.constant 0 : index
    %216 = vector.load %arg14[%c0_78, %c0_79] : memref<1x32xf32, #tpu.memory_space<vmem>>, vector<1x32xf32>
    %cst_80 = arith.constant dense<0.000000e+00> : vector<16xf32>
    %217 = vector.multi_reduction <add>, %214, %cst_80 [1] : vector<16x32xf32> to vector<16xf32>
    %218 = vector.shape_cast %217 : vector<16xf32> to vector<16x1xf32>
    %cst_81 = arith.constant 3.200000e+01 : f32
    %219 = vector.broadcast %cst_81 : f32 to vector<16x1xf32>
    %220 = arith.divf %218, %219 : vector<16x1xf32>
    %221 = vector.broadcast %220 : vector<16x1xf32> to vector<16x32xf32>
    %222 = arith.subf %214, %221 : vector<16x32xf32>
    %223 = arith.mulf %222, %222 : vector<16x32xf32>
    %cst_82 = arith.constant dense<0.000000e+00> : vector<16xf32>
    %224 = vector.multi_reduction <add>, %223, %cst_82 [1] : vector<16x32xf32> to vector<16xf32>
    %225 = vector.shape_cast %224 : vector<16xf32> to vector<16x1xf32>
    %cst_83 = arith.constant 3.200000e+01 : f32
    %226 = vector.broadcast %cst_83 : f32 to vector<16x1xf32>
    %227 = arith.divf %225, %226 : vector<16x1xf32>
    %228 = vector.broadcast %220 : vector<16x1xf32> to vector<16x32xf32>
    %229 = arith.subf %214, %228 : vector<16x32xf32>
    %cst_84 = arith.constant 9.99999974E-6 : f32
    %230 = vector.broadcast %cst_84 : f32 to vector<16x1xf32>
    %231 = arith.addf %227, %230 : vector<16x1xf32>
    %232 = math.rsqrt %231 : vector<16x1xf32>
    %233 = vector.broadcast %232 : vector<16x1xf32> to vector<16x32xf32>
    %234 = arith.mulf %229, %233 : vector<16x32xf32>
    %235 = vector.broadcast %215 : vector<1x32xf32> to vector<16x32xf32>
    %236 = arith.mulf %234, %235 : vector<16x32xf32>
    %237 = vector.broadcast %216 : vector<1x32xf32> to vector<16x32xf32>
    %238 = arith.addf %236, %237 : vector<16x32xf32>
    %c0_85 = arith.constant 0 : index
    %c0_86 = arith.constant 0 : index
    %239 = vector.load %arg15[%c0_85, %c0_86] : memref<32x128xf32, #tpu.memory_space<vmem>>, vector<32x128xf32>
    %240 = arith.truncf %238 : vector<16x32xf32> to vector<16x32xbf16>
    %241 = arith.truncf %239 : vector<32x128xf32> to vector<32x128xbf16>
    %cst_87 = arith.constant dense<0.000000e+00> : vector<16x128xf32>
    %242 = tpu.matmul %240, %241, %cst_87 {dimension_numbers = #tpu.dot_dimension_numbers<[1], [0], [0], [1], [0, 0, 1, 1], [], []>} : vector<16x32xbf16>, vector<32x128xbf16>, vector<16x128xf32> -> vector<16x128xf32>
    %c0_88 = arith.constant 0 : index
    %c0_89 = arith.constant 0 : index
    %243 = vector.load %arg16[%c0_88, %c0_89] : memref<1x128xf32, #tpu.memory_space<vmem>>, vector<1x128xf32>
    %244 = vector.broadcast %243 : vector<1x128xf32> to vector<16x128xf32>
    %245 = arith.addf %242, %244 : vector<16x128xf32>
    %c0_90 = arith.constant 0 : index
    %c0_91 = arith.constant 0 : index
    %246 = vector.load %arg17[%c0_90, %c0_91] : memref<16x128xf32, #tpu.memory_space<vmem>>, vector<16x128xf32>
    tpu.vector_store %arg17[%c0_90, %c0_91], %245 {strides = array<i32>} : memref<16x128xf32, #tpu.memory_space<vmem>>, vector<16x128xf32>,
    return
  }
}

</mosaic_0001>

<llo_original>
// kernel: encoder_with_head.1
$region0: #{encoder_with_head.1}
  #allocation0 [shape = 'u32[]', space=smem, size = 0x4, offset = 0x4, fixed_abs, tag = 'smem constant byte address 0x4 - core index']
  #allocation1 [shape = 'u32[144,128]{1,0:T(1,128)}', space=vmem, size = 0x12000, scoped, tag = 'internal scratch']
  %s0 = inlined_call_operand.vmem [shape: s32[16,1], index: 0, kind: input, shape index: {}]
  %s1 = inlined_call_operand.vmem [shape: f32[64,32], index: 1, kind: input, shape index: {}]
  %s2 = inlined_call_operand.vmem [shape: f32[16,32], index: 2, kind: input, shape index: {}]
  %s3 = inlined_call_operand.vmem [shape: f32[32,96], index: 3, kind: input, shape index: {}]
  %s4 = inlined_call_operand.vmem [shape: f32[1,96], index: 4, kind: input, shape index: {}]
  %s5 = inlined_call_operand.vmem [shape: f32[32,32], index: 5, kind: input, shape index: {}]
  %s6 = inlined_call_operand.vmem [shape: f32[1,32], index: 6, kind: input, shape index: {}, may-alias: {6,8,12,14}]
  %s7 = inlined_call_operand.vmem [shape: f32[1,32], index: 7, kind: input, shape index: {}, may-alias: {7,13}]
  %s8 = inlined_call_operand.vmem [shape: f32[1,32], index: 8, kind: input, shape index: {}, may-alias: {6,8,12,14}]
  %s9 = inlined_call_operand.hbm [shape: f32[32,64], index: 9, kind: input, shape index: {}]
  %s10 = inlined_call_operand.vmem [shape: f32[1,64], index: 10, kind: input, shape index: {}]
  %s11 = inlined_call_operand.vmem [shape: f32[64,32], index: 11, kind: input, shape index: {}]
  %s12 = inlined_call_operand.vmem [shape: f32[1,32], index: 12, kind: input, shape index: {}, may-alias: {6,8,12,14}]
  %s13 = inlined_call_operand.vmem [shape: f32[1,32], index: 13, kind: input, shape index: {}, may-alias: {7,13}]
  %s14 = inlined_call_operand.vmem [shape: f32[1,32], index: 14, kind: input, shape index: {}, may-alias: {6,8,12,14}]
  %s15 = inlined_call_operand.vmem [shape: f32[32,128], index: 15, kind: input, shape index: {}]
  %s16 = inlined_call_operand.vmem [shape: f32[1,128], index: 16, kind: input, shape index: {}]
  %s17 = inlined_call_operand.hbm [shape: f32[16,128], index: 17, kind: output, shape index: {}]
  %s18 = sld [smem:[#allocation0]]
  $region82: #{encoder_with_head.1} parent=0
    _
  %s20 = ssub.s32 1, %s18
  %s21 = scalar_select 0, %s20, %s18
  $region1: #{encoder_with_head.1} parent=0
    #allocation2 [shape = 'u8[16384]{0}', space=vmem, size = 0x4000, scoped, tag = 'input window, operand 9, single buffered']
    #allocation3 [shape = 's32[1]{0}', space=sflag, size = 0x4, scoped, tag = 'scoped memory for encoder_with_head.1']
    #allocation4 [shape = 's32[1]{0}', space=sflag, size = 0x4, scoped, tag = 'scoped memory for encoder_with_head.1']
    #allocation5 [shape = 'u8[8192]{0}', space=vmem, size = 0x2000, scoped, tag = 'output window, operand 0, single buffered']
    %22 = vsyncpa [#allocation3], 0
    %23 = vsyncpa [#allocation4], 0
    // Predicated region
    $region2: #{encoder_with_head.1} parent=1 // pred_check
      _
    $region3: #{encoder_with_head.1} parent=1 // pred_check_branch
      %25 = sbr.rel (0) target = $region5
    $region4: #{encoder_with_head.1} parent=1 // pred_region
      _
    $region5: #{encoder_with_head.1} parent=1 // pred_fallthru
      _
    // Predicated region
    $region6: #{encoder_with_head.1} parent=1 // pred_check
      _
    $region7: #{encoder_with_head.1} parent=1 // pred_check_branch
      %27 = sbr.rel (0) target = $region9
    $region8: #{encoder_with_head.1} parent=1 // pred_region
      _
    $region9: #{encoder_with_head.1} parent=1 // pred_fallthru
      _
    // Predicated region
    $region10: #{encoder_with_head.1} parent=1 // pred_check
      _
    $region11: #{encoder_with_head.1} parent=1 // pred_check_branch
      %29 = sbr.rel (0) target = $region13
    $region12: #{encoder_with_head.1} parent=1 // pred_region
      _
    $region13: #{encoder_with_head.1} parent=1 // pred_fallthru
      _
    // Predicated region
    $region14: #{encoder_with_head.1} parent=1 // pred_check
      _
    $region15: #{encoder_with_head.1} parent=1 // pred_check_branch
      %31 = sbr.rel (0) target = $region17
    $region16: #{encoder_with_head.1} parent=1 // pred_region
      _
    $region17: #{encoder_with_head.1} parent=1 // pred_fallthru
      _
    // Predicated region
    $region18: #{encoder_with_head.1} parent=1 // pred_check
      _
    $region19: #{encoder_with_head.1} parent=1 // pred_check_branch
      %33 = sbr.rel (0) target = $region21
    $region20: #{encoder_with_head.1} parent=1 // pred_region
      _
    $region21: #{encoder_with_head.1} parent=1 // pred_fallthru
      _
    // Predicated region
    $region22: #{encoder_with_head.1} parent=1 // pred_check
      _
    $region23: #{encoder_with_head.1} parent=1 // pred_check_branch
      %35 = sbr.rel (0) target = $region25
    $region24: #{encoder_with_head.1} parent=1 // pred_region
      _
    $region25: #{encoder_with_head.1} parent=1 // pred_fallthru
      _
    // Predicated region
    $region26: #{encoder_with_head.1} parent=1 // pred_check
      _
    $region27: #{encoder_with_head.1} parent=1 // pred_check_branch
      %37 = sbr.rel (0) target = $region29
    $region28: #{encoder_with_head.1} parent=1 // pred_region
      _
    $region29: #{encoder_with_head.1} parent=1 // pred_fallthru
      _
    // Predicated region
    $region30: #{encoder_with_head.1} parent=1 // pred_check
      _
    $region31: #{encoder_with_head.1} parent=1 // pred_check_branch
      %39 = sbr.rel (0) target = $region33
    $region32: #{encoder_with_head.1} parent=1 // pred_region
      _
    $region33: #{encoder_with_head.1} parent=1 // pred_fallthru
      _
    // Predicated region
    $region34: #{encoder_with_head.1} parent=1 // pred_check
      _
    $region35: #{encoder_with_head.1} parent=1 // pred_check_branch
      %41 = sbr.rel (0) target = $region37
    $region36: #{encoder_with_head.1} parent=1 // pred_region
      _
    $region37: #{encoder_with_head.1} parent=1 // pred_fallthru
      _
    // Predicated region
    $region38: #{encoder_with_head.1} parent=1 // pred_check
      _
    $region39: #{encoder_with_head.1} parent=1 // pred_check_branch
      %43 = sbr.rel (0) target = $region41
    $region40: #{encoder_with_head.1} parent=1 // pred_region
      %s45 = ssub.s32 512, 512
      %46 = vsyncadd [#allocation3], %s45
      %s47 = sshll.u32 [#allocation2], 4
      %s48 = int_to_ptr.vmem [resolvable:$true] %s47
      %53 = dma.hbm_to_vmem [thread:$0]  %s9, 512, %s48, [#allocation3], 128, 128, 8
    $region41: #{encoder_with_head.1} parent=1 // pred_fallthru
      _
    // Predicated region
    $region42: #{encoder_with_head.1} parent=1 // pred_check
      _
    $region43: #{encoder_with_head.1} parent=1 // pred_check_branch
      %55 = sbr.rel (0) target = $region45
    $region44: #{encoder_with_head.1} parent=1 // pred_region
      _
    $region45: #{encoder_with_head.1} parent=1 // pred_fallthru
      _
    // Predicated region
    $region46: #{encoder_with_head.1} parent=1 // pred_check
      _
    $region47: #{encoder_with_head.1} parent=1 // pred_check_branch
      %57 = sbr.rel (0) target = $region49
    $region48: #{encoder_with_head.1} parent=1 // pred_region
      _
    $region49: #{encoder_with_head.1} parent=1 // pred_fallthru
      _
    // Predicated region
    $region50: #{encoder_with_head.1} parent=1 // pred_check
      _
    $region51: #{encoder_with_head.1} parent=1 // pred_check_branch
      %59 = sbr.rel (0) target = $region53
    $region52: #{encoder_with_head.1} parent=1 // pred_region
      _
    $region53: #{encoder_with_head.1} parent=1 // pred_fallthru
      _
    // Predicated region
    $region54: #{encoder_with_head.1} parent=1 // pred_check
      _
    $region55: #{encoder_with_head.1} parent=1 // pred_check_branch
      %61 = sbr.rel (0) target = $region57
    $region56: #{encoder_with_head.1} parent=1 // pred_region
      _
    $region57: #{encoder_with_head.1} parent=1 // pred_fallthru
      _
    // Predicated region
    $region58: #{encoder_with_head.1} parent=1 // pred_check
      _
    $region59: #{encoder_with_head.1} parent=1 // pred_check_branch
      %63 = sbr.rel (0) target = $region61
    $region60: #{encoder_with_head.1} parent=1 // pred_region
      _
    $region61: #{encoder_with_head.1} parent=1 // pred_fallthru
      _
    // Predicated region
    $region62: #{encoder_with_head.1} parent=1 // pred_check
      _
    $region63: #{encoder_with_head.1} parent=1 // pred_check_branch
      %65 = sbr.rel (0) target = $region65
    $region64: #{encoder_with_head.1} parent=1 // pred_region
      _
    $region65: #{encoder_with_head.1} parent=1 // pred_fallthru
      _
    // Predicated region
    $region66: #{encoder_with_head.1} parent=1 // pred_check
      _
    $region67: #{encoder_with_head.1} parent=1 // pred_check_branch
      %67 = sbr.rel (0) target = $region69
    $region68: #{encoder_with_head.1} parent=1 // pred_region
      _
    $region69: #{encoder_with_head.1} parent=1 // pred_fallthru
      _
    // Predicated region
    $region70: #{encoder_with_head.1} parent=1 // pred_check
      _
    $region71: #{encoder_with_head.1} parent=1 // pred_check_branch
      %69 = sbr.rel (0) target = $region73
    $region72: #{encoder_with_head.1} parent=1 // pred_region
      %70 = dma.done [#allocation3], 512
    $region73: #{encoder_with_head.1} parent=1 // pred_fallthru
      _
    %v72 = vld [vmem:[%s0] sm:$0xff]
    %v73 = vld [vmem:[%s0 + $0x8] sm:$0xff]
    %v74 = vlaneseq
    %v75 = vand.u32 %v74, 127
    %76 = vset.pattern.permute.xlu0 0
    %77 = vperm.xlu0 %76, %v72
    %v78 = vpop.permute.xlu0 %77
    %79 = vset.pattern.permute.xlu0 0
    %80 = vperm.xlu0 %79, %v73
    %v81 = vpop.permute.xlu0 %80
    %vm82 = vcmp.eq.s32.totalorder %v78, %v75
    %vm83 = vcmp.eq.s32.totalorder %v81, %v75
    %v84 = vsel %vm82, 1, 0
    %v85 = vsel %vm83, 1, 0
    %v86 = vcvt.s32.f32 %v84
    %v87 = vcvt.s32.f32 %v85
    %v88 = vld [vmem:[%s1] sm:$0xff]
    %v89 = vld [vmem:[%s1 + $0x8] sm:$0xff]
    %v90 = vld [vmem:[%s1 + $0x10] sm:$0xff]
    %v91 = vld [vmem:[%s1 + $0x18] sm:$0xff]
    %v92 = vld [vmem:[%s1 + $0x20] sm:$0xff]
    %v93 = vld [vmem:[%s1 + $0x28] sm:$0xff]
    %v94 = vld [vmem:[%s1 + $0x30] sm:$0xff]
    %v95 = vld [vmem:[%s1 + $0x38] sm:$0xff]
    %vm96 = vcmask 523264
    %v98 = vsel %vm96, %v86, 0
    %v101 = vsel %vm96, %v87, 0
    %103 = vmatprep.subr.mxu0 0.0
    %104 = vmatpush1.msra.mxu0 %v88
    %105 = vmatprep.subr.mxu0 0.0
    %106 = vmatpush1.msra.mxu0 %v89
    %107 = vmatprep.subr.mxu0 0.0
    %108 = vmatpush1.msra.mxu0 %v90
    %109 = vmatprep.subr.mxu0 0.0
    %110 = vmatpush1.msra.mxu0 %v91
    %111 = vmatprep.subr.mxu0 0.0
    %112 = vmatpush1.msra.mxu0 %v92
    %113 = vmatprep.subr.mxu0 0.0
    %114 = vmatpush1.msra.mxu0 %v93
    %115 = vmatprep.subr.mxu0 0.0
    %116 = vmatpush1.msra.mxu0 %v94
    %117 = vmatprep.subr.mxu0 0.0
    %118 = vmatpush1.msra.mxu0 %v95
    %119 = vmatprep.subr.mxu0 0.0
    %120 = vmatpush1.msra.mxu0 0.0
    %121 = vmatprep.subr.mxu0 0.0
    %122 = vmatpush1.msra.mxu0 0.0
    %123 = vmatprep.subr.mxu0 0.0
    %124 = vmatpush1.msra.mxu0 0.0
    %125 = vmatprep.subr.mxu0 0.0
    %126 = vmatpush1.msra.mxu0 0.0
    %127 = vmatprep.subr.mxu0 0.0
    %128 = vmatpush1.msra.mxu0 0.0
    %129 = vmatprep.subr.mxu0 0.0
    %130 = vmatpush1.msra.mxu0 0.0
    %131 = vmatprep.subr.mxu0 0.0
    %132 = vmatpush1.msra.mxu0 0.0
    %133 = vmatprep.subr.mxu0 0.0
    %134 = vmatpush1.msra.mxu0 0.0
    %135 = vmatprep.subr.mxu0 0.0
    %136 = vmatpush1.msra.mxu0 0.0
    %137 = vmatprep.subr.mxu0 0.0
    %138 = vmatpush1.msra.mxu0 0.0
    %139 = vmatprep.subr.mxu0 0.0
    %140 = vmatpush1.msra.mxu0 0.0
    %141 = vmatprep.subr.mxu0 0.0
    %142 = vmatpush1.msra.mxu0 0.0
    %143 = vmatprep.subr.mxu0 0.0
    %144 = vmatpush1.msra.mxu0 0.0
    %145 = vmatprep.subr.mxu0 0.0
    %146 = vmatpush1.msra.mxu0 0.0
    %147 = vmatprep.subr.mxu0 0.0
    %148 = vmatpush1.msra.mxu0 0.0
    %149 = vmatprep.subr.mxu0 0.0
    %150 = vmatpush1.msra.mxu0 0.0
    %151 = vmatprep.subr.mxu0 0.0
    %152 = vmatpush1.msra.mxu0 0.0
    %153 = vmatprep.subr.mxu0 0.0
    %154 = vmatpush1.msra.mxu0 0.0
    %155 = vmatprep.subr.mxu0 0.0
    %156 = vmatpush1.msra.mxu0 0.0
    %157 = vmatprep.subr.mxu0 0.0
    %158 = vmatpush1.msra.mxu0 0.0
    %159 = vmatprep.subr.mxu0 0.0
    %160 = vmatpush1.msra.mxu0 0.0
    %161 = vmatprep.subr.mxu0 0.0
    %162 = vmatpush1.msra.mxu0 0.0
    %163 = vmatprep.subr.mxu0 0.0
    %164 = vmatpush1.msra.mxu0 0.0
    %165 = vmatprep.subr.mxu0 0.0
    %166 = vmatpush1.msra.mxu0 0.0
    %167 = vmatprep.mubr.f32.mxu0 0.0
    %168 = vmatmul.mubr.f32.gmra.mrb[0].mxu0 %v98
    %v169 = vpop.f32.mrb[0].mxu0
    %v170 = vadd.f32 0.0, %v169
    %v171 = vpop.f32.mrb[0].mxu0
    %172 = vmatprep.mubr.f32.mxu0 0.0
    %173 = vmatmul.mubr.f32.gmra.mrb[0].mxu0 %v101
    %v174 = vpop.f32.mrb[0].mxu0
    %v175 = vadd.f32 0.0, %v174
    %v176 = vpop.f32.mrb[0].mxu0
    %177 = vdwg.mxu0
    %v178 = vmul.f32 %v170, 5.656854
    %v179 = vmul.f32 %v175, 5.656854
    %v180 = vld [vmem:[%s2] sm:$0xff]
    %v181 = vld [vmem:[%s2 + $0x8] sm:$0xff]
    %v182 = vadd.f32 %v178, %v180
    %v183 = vadd.f32 %v179, %v181
    %v184 = vld [vmem:[%s3] sm:$0xff]
    %v185 = vld [vmem:[%s3 + $0x8] sm:$0xff]
    %v186 = vld [vmem:[%s3 + $0x10] sm:$0xff]
    %v187 = vld [vmem:[%s3 + $0x18] sm:$0xff]
    %v188 = vpack.c.bf16 %v183, %v182
    %v189 = vpack.c.bf16 %v185, %v184
    %v190 = vpack.c.bf16 %v187, %v186
    %v191 = vld [vmem:[%s4] sm:$0x1]
    %v193 = vlaneseq
    %v194 = vshrl.u32 %v193, 7
    %v195 = vsub.s32 0, %v194
    %v196 = vrot.slane %v191, %v195
    %vm198 = vcmask 261120
    %v200 = vsel %vm198, %v188, 0
    %202 = vmatprep.subr.bf16.mxu0 0
    %203 = vmatpush1.bf16.msra.mxu0 %v189
    %204 = vmatprep.subr.bf16.mxu0 0
    %205 = vmatpush1.bf16.msra.mxu0 %v190
    %206 = vmatprep.subr.bf16.mxu0 0
    %207 = vmatpush1.bf16.msra.mxu0 0
    %208 = vmatprep.subr.bf16.mxu0 0
    %209 = vmatpush1.bf16.msra.mxu0 0
    %210 = vmatprep.subr.bf16.mxu0 0
    %211 = vmatpush1.bf16.msra.mxu0 0
    %212 = vmatprep.subr.bf16.mxu0 0
    %213 = vmatpush1.bf16.msra.mxu0 0
    %214 = vmatprep.subr.bf16.mxu0 0
    %215 = vmatpush1.bf16.msra.mxu0 0
    %216 = vmatprep.subr.bf16.mxu0 0
    %217 = vmatpush1.bf16.msra.mxu0 0
    %218 = vmatprep.subr.bf16.mxu0 0
    %219 = vmatpush1.bf16.msra.mxu0 0
    %220 = vmatprep.subr.bf16.mxu0 0
    %221 = vmatpush1.bf16.msra.mxu0 0
    %222 = vmatprep.subr.bf16.mxu0 0
    %223 = vmatpush1.bf16.msra.mxu0 0
    %224 = vmatprep.subr.bf16.mxu0 0
    %225 = vmatpush1.bf16.msra.mxu0 0
    %226 = vmatprep.subr.bf16.mxu0 0
    %227 = vmatpush1.bf16.msra.mxu0 0
    %228 = vmatprep.subr.bf16.mxu0 0
    %229 = vmatpush1.bf16.msra.mxu0 0
    %230 = vmatprep.subr.bf16.mxu0 0
    %231 = vmatpush1.bf16.msra.mxu0 0
    %232 = vmatprep.subr.bf16.mxu0 0
    %233 = vmatpush1.bf16.msra.mxu0 0
    %234 = vmatprep.mubr.bf16.mxu0 0
    %235 = vmatmul.mubr.bf16.gmra.mrb[0].mxu0 %v200
    %v236 = vpop.f32.mrb[0].mxu0
    %v237 = vadd.f32 %v196, %v236
    %v238 = vpop.f32.mrb[0].mxu0
    %v239 = vpop.f32.mrb[0].mxu0
    %v240 = vadd.f32 %v196, %v239
    %v241 = vpop.f32.mrb[0].mxu0
    %242 = vdwg.mxu0
    %244 = vrot.lane.b32.xlu0 %v237, 96
    %v245 = vpop.permute.xlu0 %244
    %vm246 = vcmask 64512
    %v247 = vsel %vm246, %v237, 0
    %v249 = vsel %vm246, %v245, 0
    %251 = vmatprep.subr.mxu0 0.0
    %252 = vmatpush1.xpose.msra.mxu0 %v249
    %253 = vmatprep.subr.mxu0 0.0
    %254 = vmatpush1.xpose.msra.mxu0 0.0
    %255 = vmatprep.subr.mxu0 0.0
    %256 = vmatpush1.xpose.msra.mxu0 0.0
    %257 = vmatprep.subr.mxu0 0.0
    %258 = vmatpush1.xpose.msra.mxu0 0.0
    %259 = vmatprep.subr.mxu0 0.0
    %260 = vmatpush1.xpose.msra.mxu0 0.0
    %261 = vmatprep.subr.mxu0 0.0
    %262 = vmatpush1.xpose.msra.mxu0 0.0
    %263 = vmatprep.subr.mxu0 0.0
    %264 = vmatpush1.xpose.msra.mxu0 0.0
    %265 = vmatprep.subr.mxu0 0.0
    %266 = vmatpush1.xpose.msra.mxu0 0.0
    %267 = vmatprep.subr.mxu0 0.0
    %268 = vmatpush1.xpose.msra.mxu0 0.0
    %269 = vmatprep.subr.mxu0 0.0
    %270 = vmatpush1.xpose.msra.mxu0 0.0
    %271 = vmatprep.subr.mxu0 0.0
    %272 = vmatpush1.xpose.msra.mxu0 0.0
    %273 = vmatprep.subr.mxu0 0.0
    %274 = vmatpush1.xpose.msra.mxu0 0.0
    %275 = vmatprep.subr.mxu0 0.0
    %276 = vmatpush1.xpose.msra.mxu0 0.0
    %277 = vmatprep.subr.mxu0 0.0
    %278 = vmatpush1.xpose.msra.mxu0 0.0
    %279 = vmatprep.subr.mxu0 0.0
    %280 = vmatpush1.xpose.msra.mxu0 0.0
    %281 = vmatprep.subr.mxu0 0.0
    %282 = vmatpush1.xpose.msra.mxu0 0.0
    %283 = vmatprep.subr.mxu0 0.0
    %284 = vmatpush1.xpose.msra.mxu0 0.0
    %285 = vmatprep.subr.mxu0 0.0
    %286 = vmatpush1.xpose.msra.mxu0 0.0
    %287 = vmatprep.subr.mxu0 0.0
    %288 = vmatpush1.xpose.msra.mxu0 0.0
    %289 = vmatprep.subr.mxu0 0.0
    %290 = vmatpush1.xpose.msra.mxu0 0.0
    %291 = vmatprep.subr.mxu0 0.0
    %292 = vmatpush1.xpose.msra.mxu0 0.0
    %293 = vmatprep.subr.mxu0 0.0
    %294 = vmatpush1.xpose.msra.mxu0 0.0
    %295 = vmatprep.subr.mxu0 0.0
    %296 = vmatpush1.xpose.msra.mxu0 0.0
    %297 = vmatprep.subr.mxu0 0.0
    %298 = vmatpush1.xpose.msra.mxu0 0.0
    %299 = vmatprep.subr.mxu0 0.0
    %300 = vmatpush1.xpose.msra.mxu0 0.0
    %301 = vmatprep.subr.mxu0 0.0
    %302 = vmatpush1.xpose.msra.mxu0 0.0
    %303 = vmatprep.subr.mxu0 0.0
    %304 = vmatpush1.xpose.msra.mxu0 0.0
    %305 = vmatprep.subr.mxu0 0.0
    %306 = vmatpush1.xpose.msra.mxu0 0.0
    %307 = vmatprep.subr.mxu0 0.0
    %308 = vmatpush1.xpose.msra.mxu0 0.0
    %309 = vmatprep.subr.mxu0 0.0
    %310 = vmatpush1.xpose.msra.mxu0 0.0
    %311 = vmatprep.subr.mxu0 0.0
    %312 = vmatpush1.xpose.msra.mxu0 0.0
    %313 = vmatprep.subr.mxu0 0.0
    %314 = vmatpush1.xpose.msra.mxu0 0.0
    %315 = vmatprep.mubr.f32.mxu0 0.0
    %316 = vmatmul.mubr.f32.gmra.mrb[0].mxu0 %v247
    %v317 = vpop.f32.mrb[0].mxu0
    %v318 = vadd.f32 0.0, %v317
    %v319 = vpop.f32.mrb[0].mxu0
    %320 = vdwg.mxu0
    %v321 = vmul.f32 %v318, 0.35355338
    %v322 = vsel %vm246, %v321, -inf
    %323 = vmax.xlane.f32.xlu0 %v322
    %v324 = vpop.xlane.xlu0 %323
    %v325 = vsub.f32 %v321, %v324
    %v326 = vmul.f32 %v325, 1.442695
    %v327 = vpow.pop %v326
    %v328 = vsel %vm246, %v327, 0.0
    %329 = vadd.xlane.f32.xlu0 %v328
    %v330 = vpop.xlane.xlu0 %329
    %v331 = vrcp.pop %v330
    %v332 = vmul.f32 %v327, %v331
    %333 = vrot.lane.b32.xlu0 %v237, 64
    %v334 = vpop.permute.xlu0 %333
    %v337 = vsel %vm246, %v332, 0
    %339 = vmatprep.subr.mxu0 0.0
    %340 = vmatpush1.msra.mxu0 %v334
    %341 = vmatprep.subr.mxu0 0.0
    %342 = vmatpush1.msra.mxu0 0.0
    %343 = vmatprep.subr.mxu0 0.0
    %344 = vmatpush1.msra.mxu0 0.0
    %345 = vmatprep.subr.mxu0 0.0
    %346 = vmatpush1.msra.mxu0 0.0
    %347 = vmatprep.subr.mxu0 0.0
    %348 = vmatpush1.msra.mxu0 0.0
    %349 = vmatprep.subr.mxu0 0.0
    %350 = vmatpush1.msra.mxu0 0.0
    %351 = vmatprep.subr.mxu0 0.0
    %352 = vmatpush1.msra.mxu0 0.0
    %353 = vmatprep.subr.mxu0 0.0
    %354 = vmatpush1.msra.mxu0 0.0
    %355 = vmatprep.subr.mxu0 0.0
    %356 = vmatpush1.msra.mxu0 0.0
    %357 = vmatprep.subr.mxu0 0.0
    %358 = vmatpush1.msra.mxu0 0.0
    %359 = vmatprep.subr.mxu0 0.0
    %360 = vmatpush1.msra.mxu0 0.0
    %361 = vmatprep.subr.mxu0 0.0
    %362 = vmatpush1.msra.mxu0 0.0
    %363 = vmatprep.subr.mxu0 0.0
    %364 = vmatpush1.msra.mxu0 0.0
    %365 = vmatprep.subr.mxu0 0.0
    %366 = vmatpush1.msra.mxu0 0.0
    %367 = vmatprep.subr.mxu0 0.0
    %368 = vmatpush1.msra.mxu0 0.0
    %369 = vmatprep.subr.mxu0 0.0
    %370 = vmatpush1.msra.mxu0 0.0
    %371 = vmatprep.subr.mxu0 0.0
    %372 = vmatpush1.msra.mxu0 0.0
    %373 = vmatprep.subr.mxu0 0.0
    %374 = vmatpush1.msra.mxu0 0.0
    %375 = vmatprep.subr.mxu0 0.0
    %376 = vmatpush1.msra.mxu0 0.0
    %377 = vmatprep.subr.mxu0 0.0
    %378 = vmatpush1.msra.mxu0 0.0
    %379 = vmatprep.subr.mxu0 0.0
    %380 = vmatpush1.msra.mxu0 0.0
    %381 = vmatprep.subr.mxu0 0.0
    %382 = vmatpush1.msra.mxu0 0.0
    %383 = vmatprep.subr.mxu0 0.0
    %384 = vmatpush1.msra.mxu0 0.0
    %385 = vmatprep.subr.mxu0 0.0
    %386 = vmatpush1.msra.mxu0 0.0
    %387 = vmatprep.subr.mxu0 0.0
    %388 = vmatpush1.msra.mxu0 0.0
    %389 = vmatprep.subr.mxu0 0.0
    %390 = vmatpush1.msra.mxu0 0.0
    %391 = vmatprep.subr.mxu0 0.0
    %392 = vmatpush1.msra.mxu0 0.0
    %393 = vmatprep.subr.mxu0 0.0
    %394 = vmatpush1.msra.mxu0 0.0
    %395 = vmatprep.subr.mxu0 0.0
    %396 = vmatpush1.msra.mxu0 0.0
    %397 = vmatprep.subr.mxu0 0.0
    %398 = vmatpush1.msra.mxu0 0.0
    %399 = vmatprep.subr.mxu0 0.0
    %400 = vmatpush1.msra.mxu0 0.0
    %401 = vmatprep.subr.mxu0 0.0
    %402 = vmatpush1.msra.mxu0 0.0
    %403 = vmatprep.mubr.f32.mxu0 0.0
    %404 = vmatmul.mubr.f32.gmra.mrb[0].mxu0 %v337
    %v405 = vpop.f32.mrb[0].mxu0
    %v406 = vadd.f32 0.0, %v405
    %v407 = vpop.f32.mrb[0].mxu0
    %408 = vdwg.mxu0
    %409 = vrot.lane.b32.xlu0 %v237, 120
    %v410 = vpop.permute.xlu0 %409
    %411 = vrot.lane.b32.xlu0 %v237, 88
    %v412 = vpop.permute.xlu0 %411
    %v413 = vsel %vm246, %v410, 0
    %v415 = vsel %vm246, %v412, 0
    %417 = vmatprep.subr.mxu0 0.0
    %418 = vmatpush1.xpose.msra.mxu0 %v415
    %419 = vmatprep.subr.mxu0 0.0
    %420 = vmatpush1.xpose.msra.mxu0 0.0
    %421 = vmatprep.subr.mxu0 0.0
    %422 = vmatpush1.xpose.msra.mxu0 0.0
    %423 = vmatprep.subr.mxu0 0.0
    %424 = vmatpush1.xpose.msra.mxu0 0.0
    %425 = vmatprep.subr.mxu0 0.0
    %426 = vmatpush1.xpose.msra.mxu0 0.0
    %427 = vmatprep.subr.mxu0 0.0
    %428 = vmatpush1.xpose.msra.mxu0 0.0
    %429 = vmatprep.subr.mxu0 0.0
    %430 = vmatpush1.xpose.msra.mxu0 0.0
    %431 = vmatprep.subr.mxu0 0.0
    %432 = vmatpush1.xpose.msra.mxu0 0.0
    %433 = vmatprep.subr.mxu0 0.0
    %434 = vmatpush1.xpose.msra.mxu0 0.0
    %435 = vmatprep.subr.mxu0 0.0
    %436 = vmatpush1.xpose.msra.mxu0 0.0
    %437 = vmatprep.subr.mxu0 0.0
    %438 = vmatpush1.xpose.msra.mxu0 0.0
    %439 = vmatprep.subr.mxu0 0.0
    %440 = vmatpush1.xpose.msra.mxu0 0.0
    %441 = vmatprep.subr.mxu0 0.0
    %442 = vmatpush1.xpose.msra.mxu0 0.0
    %443 = vmatprep.subr.mxu0 0.0
    %444 = vmatpush1.xpose.msra.mxu0 0.0
    %445 = vmatprep.subr.mxu0 0.0
    %446 = vmatpush1.xpose.msra.mxu0 0.0
    %447 = vmatprep.subr.mxu0 0.0
    %448 = vmatpush1.xpose.msra.mxu0 0.0
    %449 = vmatprep.subr.mxu0 0.0
    %450 = vmatpush1.xpose.msra.mxu0 0.0
    %451 = vmatprep.subr.mxu0 0.0
    %452 = vmatpush1.xpose.msra.mxu0 0.0
    %453 = vmatprep.subr.mxu0 0.0
    %454 = vmatpush1.xpose.msra.mxu0 0.0
    %455 = vmatprep.subr.mxu0 0.0
    %456 = vmatpush1.xpose.msra.mxu0 0.0
    %457 = vmatprep.subr.mxu0 0.0
    %458 = vmatpush1.xpose.msra.mxu0 0.0
    %459 = vmatprep.subr.mxu0 0.0
    %460 = vmatpush1.xpose.msra.mxu0 0.0
    %461 = vmatprep.subr.mxu0 0.0
    %462 = vmatpush1.xpose.msra.mxu0 0.0
    %463 = vmatprep.subr.mxu0 0.0
    %464 = vmatpush1.xpose.msra.mxu0 0.0
    %465 = vmatprep.subr.mxu0 0.0
    %466 = vmatpush1.xpose.msra.mxu0 0.0
    %467 = vmatprep.subr.mxu0 0.0
    %468 = vmatpush1.xpose.msra.mxu0 0.0
    %469 = vmatprep.subr.mxu0 0.0
    %470 = vmatpush1.xpose.msra.mxu0 0.0
    %471 = vmatprep.subr.mxu0 0.0
    %472 = vmatpush1.xpose.msra.mxu0 0.0
    %473 = vmatprep.subr.mxu0 0.0
    %474 = vmatpush1.xpose.msra.mxu0 0.0
    %475 = vmatprep.subr.mxu0 0.0
    %476 = vmatpush1.xpose.msra.mxu0 0.0
    %477 = vmatprep.subr.mxu0 0.0
    %478 = vmatpush1.xpose.msra.mxu0 0.0
    %479 = vmatprep.subr.mxu0 0.0
    %480 = vmatpush1.xpose.msra.mxu0 0.0
    %481 = vmatprep.mubr.f32.mxu0 0.0
    %482 = vmatmul.mubr.f32.gmra.mrb[0].mxu0 %v413
    %v483 = vpop.f32.mrb[0].mxu0
    %v484 = vadd.f32 0.0, %v483
    %v485 = vpop.f32.mrb[0].mxu0
    %486 = vdwg.mxu0
    %v487 = vmul.f32 %v484, 0.35355338
    %v488 = vsel %vm246, %v487, -inf
    %489 = vmax.xlane.f32.xlu0 %v488
    %v490 = vpop.xlane.xlu0 %489
    %v491 = vsub.f32 %v487, %v490
    %v492 = vmul.f32 %v491, 1.442695
    %v493 = vpow.pop %v492
    %v494 = vsel %vm246, %v493, 0.0
    %495 = vadd.xlane.f32.xlu0 %v494
    %v496 = vpop.xlane.xlu0 %495
    %v497 = vrcp.pop %v496
    %v498 = vmul.f32 %v493, %v497
    %499 = vrot.lane.b32.xlu0 %v237, 56
    %v500 = vpop.permute.xlu0 %499
    %v503 = vsel %vm246, %v498, 0
    %505 = vmatprep.subr.mxu0 0.0
    %506 = vmatpush1.msra.mxu0 %v500
    %507 = vmatprep.subr.mxu0 0.0
    %508 = vmatpush1.msra.mxu0 0.0
    %509 = vmatprep.subr.mxu0 0.0
    %510 = vmatpush1.msra.mxu0 0.0
    %511 = vmatprep.subr.mxu0 0.0
    %512 = vmatpush1.msra.mxu0 0.0
    %513 = vmatprep.subr.mxu0 0.0
    %514 = vmatpush1.msra.mxu0 0.0
    %515 = vmatprep.subr.mxu0 0.0
    %516 = vmatpush1.msra.mxu0 0.0
    %517 = vmatprep.subr.mxu0 0.0
    %518 = vmatpush1.msra.mxu0 0.0
    %519 = vmatprep.subr.mxu0 0.0
    %520 = vmatpush1.msra.mxu0 0.0
    %521 = vmatprep.subr.mxu0 0.0
    %522 = vmatpush1.msra.mxu0 0.0
    %523 = vmatprep.subr.mxu0 0.0
    %524 = vmatpush1.msra.mxu0 0.0
    %525 = vmatprep.subr.mxu0 0.0
    %526 = vmatpush1.msra.mxu0 0.0
    %527 = vmatprep.subr.mxu0 0.0
    %528 = vmatpush1.msra.mxu0 0.0
    %529 = vmatprep.subr.mxu0 0.0
    %530 = vmatpush1.msra.mxu0 0.0
    %531 = vmatprep.subr.mxu0 0.0
    %532 = vmatpush1.msra.mxu0 0.0
    %533 = vmatprep.subr.mxu0 0.0
    %534 = vmatpush1.msra.mxu0 0.0
    %535 = vmatprep.subr.mxu0 0.0
    %536 = vmatpush1.msra.mxu0 0.0
    %537 = vmatprep.subr.mxu0 0.0
    %538 = vmatpush1.msra.mxu0 0.0
    %539 = vmatprep.subr.mxu0 0.0
    %540 = vmatpush1.msra.mxu0 0.0
    %541 = vmatprep.subr.mxu0 0.0
    %542 = vmatpush1.msra.mxu0 0.0
    %543 = vmatprep.subr.mxu0 0.0
    %544 = vmatpush1.msra.mxu0 0.0
    %545 = vmatprep.subr.mxu0 0.0
    %546 = vmatpush1.msra.mxu0 0.0
    %547 = vmatprep.subr.mxu0 0.0
    %548 = vmatpush1.msra.mxu0 0.0
    %549 = vmatprep.subr.mxu0 0.0
    %550 = vmatpush1.msra.mxu0 0.0
    %551 = vmatprep.subr.mxu0 0.0
    %552 = vmatpush1.msra.mxu0 0.0
    %553 = vmatprep.subr.mxu0 0.0
    %554 = vmatpush1.msra.mxu0 0.0
    %555 = vmatprep.subr.mxu0 0.0
    %556 = vmatpush1.msra.mxu0 0.0
    %557 = vmatprep.subr.mxu0 0.0
    %558 = vmatpush1.msra.mxu0 0.0
    %559 = vmatprep.subr.mxu0 0.0
    %560 = vmatpush1.msra.mxu0 0.0
    %561 = vmatprep.subr.mxu0 0.0
    %562 = vmatpush1.msra.mxu0 0.0
    %563 = vmatprep.subr.mxu0 0.0
    %564 = vmatpush1.msra.mxu0 0.0
    %565 = vmatprep.subr.mxu0 0.0
    %566 = vmatpush1.msra.mxu0 0.0
    %567 = vmatprep.subr.mxu0 0.0
    %568 = vmatpush1.msra.mxu0 0.0
    %569 = vmatprep.mubr.f32.mxu0 0.0
    %570 = vmatmul.mubr.f32.gmra.mrb[0].mxu0 %v503
    %v571 = vpop.f32.mrb[0].mxu0
    %v572 = vadd.f32 0.0, %v571
    %v573 = vpop.f32.mrb[0].mxu0
    %574 = vdwg.mxu0
    %575 = vrot.lane.b32.xlu0 %v237, 112
    %v576 = vpop.permute.xlu0 %575
    %577 = vrot.lane.b32.xlu0 %v237, 80
    %v578 = vpop.permute.xlu0 %577
    %v579 = vsel %vm246, %v576, 0
    %v581 = vsel %vm246, %v578, 0
    %583 = vmatprep.subr.mxu0 0.0
    %584 = vmatpush1.xpose.msra.mxu0 %v581
    %585 = vmatprep.subr.mxu0 0.0
    %586 = vmatpush1.xpose.msra.mxu0 0.0
    %587 = vmatprep.subr.mxu0 0.0
    %588 = vmatpush1.xpose.msra.mxu0 0.0
    %589 = vmatprep.subr.mxu0 0.0
    %590 = vmatpush1.xpose.msra.mxu0 0.0
    %591 = vmatprep.subr.mxu0 0.0
    %592 = vmatpush1.xpose.msra.mxu0 0.0
    %593 = vmatprep.subr.mxu0 0.0
    %594 = vmatpush1.xpose.msra.mxu0 0.0
    %595 = vmatprep.subr.mxu0 0.0
    %596 = vmatpush1.xpose.msra.mxu0 0.0
    %597 = vmatprep.subr.mxu0 0.0
    %598 = vmatpush1.xpose.msra.mxu0 0.0
    %599 = vmatprep.subr.mxu0 0.0
    %600 = vmatpush1.xpose.msra.mxu0 0.0
    %601 = vmatprep.subr.mxu0 0.0
    %602 = vmatpush1.xpose.msra.mxu0 0.0
    %603 = vmatprep.subr.mxu0 0.0
    %604 = vmatpush1.xpose.msra.mxu0 0.0
    %605 = vmatprep.subr.mxu0 0.0
    %606 = vmatpush1.xpose.msra.mxu0 0.0
    %607 = vmatprep.subr.mxu0 0.0
    %608 = vmatpush1.xpose.msra.mxu0 0.0
    %609 = vmatprep.subr.mxu0 0.0
    %610 = vmatpush1.xpose.msra.mxu0 0.0
    %611 = vmatprep.subr.mxu0 0.0
    %612 = vmatpush1.xpose.msra.mxu0 0.0
    %613 = vmatprep.subr.mxu0 0.0
    %614 = vmatpush1.xpose.msra.mxu0 0.0
    %615 = vmatprep.subr.mxu0 0.0
    %616 = vmatpush1.xpose.msra.mxu0 0.0
    %617 = vmatprep.subr.mxu0 0.0
    %618 = vmatpush1.xpose.msra.mxu0 0.0
    %619 = vmatprep.subr.mxu0 0.0
    %620 = vmatpush1.xpose.msra.mxu0 0.0
    %621 = vmatprep.subr.mxu0 0.0
    %622 = vmatpush1.xpose.msra.mxu0 0.0
    %623 = vmatprep.subr.mxu0 0.0
    %624 = vmatpush1.xpose.msra.mxu0 0.0
    %625 = vmatprep.subr.mxu0 0.0
    %626 = vmatpush1.xpose.msra.mxu0 0.0
    %627 = vmatprep.subr.mxu0 0.0
    %628 = vmatpush1.xpose.msra.mxu0 0.0
    %629 = vmatprep.subr.mxu0 0.0
    %630 = vmatpush1.xpose.msra.mxu0 0.0
    %631 = vmatprep.subr.mxu0 0.0
    %632 = vmatpush1.xpose.msra.mxu0 0.0
    %633 = vmatprep.subr.mxu0 0.0
    %634 = vmatpush1.xpose.msra.mxu0 0.0
    %635 = vmatprep.subr.mxu0 0.0
    %636 = vmatpush1.xpose.msra.mxu0 0.0
    %637 = vmatprep.subr.mxu0 0.0
    %638 = vmatpush1.xpose.msra.mxu0 0.0
    %639 = vmatprep.subr.mxu0 0.0
    %640 = vmatpush1.xpose.msra.mxu0 0.0
    %641 = vmatprep.subr.mxu0 0.0
    %642 = vmatpush1.xpose.msra.mxu0 0.0
    %643 = vmatprep.subr.mxu0 0.0
    %644 = vmatpush1.xpose.msra.mxu0 0.0
    %645 = vmatprep.subr.mxu0 0.0
    %646 = vmatpush1.xpose.msra.mxu0 0.0
    %647 = vmatprep.mubr.f32.mxu0 0.0
    %648 = vmatmul.mubr.f32.gmra.mrb[0].mxu0 %v579
    %v649 = vpop.f32.mrb[0].mxu0
    %v650 = vadd.f32 0.0, %v649
    %v651 = vpop.f32.mrb[0].mxu0
    %652 = vdwg.mxu0
    %v653 = vmul.f32 %v650, 0.35355338
    %v654 = vsel %vm246, %v653, -inf
    %655 = vmax.xlane.f32.xlu0 %v654
    %v656 = vpop.xlane.xlu0 %655
    %v657 = vsub.f32 %v653, %v656
    %v658 = vmul.f32 %v657, 1.442695
    %v659 = vpow.pop %v658
    %v660 = vsel %vm246, %v659, 0.0
    %661 = vadd.xlane.f32.xlu0 %v660
    %v662 = vpop.xlane.xlu0 %661
    %v663 = vrcp.pop %v662
    %v664 = vmul.f32 %v659, %v663
    %665 = vrot.lane.b32.xlu0 %v237, 48
    %v666 = vpop.permute.xlu0 %665
    %v669 = vsel %vm246, %v664, 0
    %671 = vmatprep.subr.mxu0 0.0
    %672 = vmatpush1.msra.mxu0 %v666
    %673 = vmatprep.subr.mxu0 0.0
    %674 = vmatpush1.msra.mxu0 0.0
    %675 = vmatprep.subr.mxu0 0.0
    %676 = vmatpush1.msra.mxu0 0.0
    %677 = vmatprep.subr.mxu0 0.0
    %678 = vmatpush1.msra.mxu0 0.0
    %679 = vmatprep.subr.mxu0 0.0
    %680 = vmatpush1.msra.mxu0 0.0
    %681 = vmatprep.subr.mxu0 0.0
    %682 = vmatpush1.msra.mxu0 0.0
    %683 = vmatprep.subr.mxu0 0.0
    %684 = vmatpush1.msra.mxu0 0.0
    %685 = vmatprep.subr.mxu0 0.0
    %686 = vmatpush1.msra.mxu0 0.0
    %687 = vmatprep.subr.mxu0 0.0
    %688 = vmatpush1.msra.mxu0 0.0
    %689 = vmatprep.subr.mxu0 0.0
    %690 = vmatpush1.msra.mxu0 0.0
    %691 = vmatprep.subr.mxu0 0.0
    %692 = vmatpush1.msra.mxu0 0.0
    %693 = vmatprep.subr.mxu0 0.0
    %694 = vmatpush1.msra.mxu0 0.0
    %695 = vmatprep.subr.mxu0 0.0
    %696 = vmatpush1.msra.mxu0 0.0
    %697 = vmatprep.subr.mxu0 0.0
    %698 = vmatpush1.msra.mxu0 0.0
    %699 = vmatprep.subr.mxu0 0.0
    %700 = vmatpush1.msra.mxu0 0.0
    %701 = vmatprep.subr.mxu0 0.0
    %702 = vmatpush1.msra.mxu0 0.0
    %703 = vmatprep.subr.mxu0 0.0
    %704 = vmatpush1.msra.mxu0 0.0
    %705 = vmatprep.subr.mxu0 0.0
    %706 = vmatpush1.msra.mxu0 0.0
    %707 = vmatprep.subr.mxu0 0.0
    %708 = vmatpush1.msra.mxu0 0.0
    %709 = vmatprep.subr.mxu0 0.0
    %710 = vmatpush1.msra.mxu0 0.0
    %711 = vmatprep.subr.mxu0 0.0
    %712 = vmatpush1.msra.mxu0 0.0
    %713 = vmatprep.subr.mxu0 0.0
    %714 = vmatpush1.msra.mxu0 0.0
    %715 = vmatprep.subr.mxu0 0.0
    %716 = vmatpush1.msra.mxu0 0.0
    %717 = vmatprep.subr.mxu0 0.0
    %718 = vmatpush1.msra.mxu0 0.0
    %719 = vmatprep.subr.mxu0 0.0
    %720 = vmatpush1.msra.mxu0 0.0
    %721 = vmatprep.subr.mxu0 0.0
    %722 = vmatpush1.msra.mxu0 0.0
    %723 = vmatprep.subr.mxu0 0.0
    %724 = vmatpush1.msra.mxu0 0.0
    %725 = vmatprep.subr.mxu0 0.0
    %726 = vmatpush1.msra.mxu0 0.0
    %727 = vmatprep.subr.mxu0 0.0
    %728 = vmatpush1.msra.mxu0 0.0
    %729 = vmatprep.subr.mxu0 0.0
    %730 = vmatpush1.msra.mxu0 0.0
    %731 = vmatprep.subr.mxu0 0.0
    %732 = vmatpush1.msra.mxu0 0.0
    %733 = vmatprep.subr.mxu0 0.0
    %734 = vmatpush1.msra.mxu0 0.0
    %735 = vmatprep.mubr.f32.mxu0 0.0
    %736 = vmatmul.mubr.f32.gmra.mrb[0].mxu0 %v669
    %v737 = vpop.f32.mrb[0].mxu0
    %v738 = vadd.f32 0.0, %v737
    %v739 = vpop.f32.mrb[0].mxu0
    %740 = vdwg.mxu0
    %741 = vrot.lane.b32.xlu0 %v237, 104
    %v742 = vpop.permute.xlu0 %741
    %743 = vrot.lane.b32.xlu0 %v237, 72
    %v744 = vpop.permute.xlu0 %743
    %v745 = vsel %vm246, %v742, 0
    %v747 = vsel %vm246, %v744, 0
    %749 = vmatprep.subr.mxu0 0.0
    %750 = vmatpush1.xpose.msra.mxu0 %v747
    %751 = vmatprep.subr.mxu0 0.0
    %752 = vmatpush1.xpose.msra.mxu0 0.0
    %753 = vmatprep.subr.mxu0 0.0
    %754 = vmatpush1.xpose.msra.mxu0 0.0
    %755 = vmatprep.subr.mxu0 0.0
    %756 = vmatpush1.xpose.msra.mxu0 0.0
    %757 = vmatprep.subr.mxu0 0.0
    %758 = vmatpush1.xpose.msra.mxu0 0.0
    %759 = vmatprep.subr.mxu0 0.0
    %760 = vmatpush1.xpose.msra.mxu0 0.0
    %761 = vmatprep.subr.mxu0 0.0
    %762 = vmatpush1.xpose.msra.mxu0 0.0
    %763 = vmatprep.subr.mxu0 0.0
    %764 = vmatpush1.xpose.msra.mxu0 0.0
    %765 = vmatprep.subr.mxu0 0.0
    %766 = vmatpush1.xpose.msra.mxu0 0.0
    %767 = vmatprep.subr.mxu0 0.0
    %768 = vmatpush1.xpose.msra.mxu0 0.0
    %769 = vmatprep.subr.mxu0 0.0
    %770 = vmatpush1.xpose.msra.mxu0 0.0
    %771 = vmatprep.subr.mxu0 0.0
    %772 = vmatpush1.xpose.msra.mxu0 0.0
    %773 = vmatprep.subr.mxu0 0.0
    %774 = vmatpush1.xpose.msra.mxu0 0.0
    %775 = vmatprep.subr.mxu0 0.0
    %776 = vmatpush1.xpose.msra.mxu0 0.0
    %777 = vmatprep.subr.mxu0 0.0
    %778 = vmatpush1.xpose.msra.mxu0 0.0
    %779 = vmatprep.subr.mxu0 0.0
    %780 = vmatpush1.xpose.msra.mxu0 0.0
    %781 = vmatprep.subr.mxu0 0.0
    %782 = vmatpush1.xpose.msra.mxu0 0.0
    %783 = vmatprep.subr.mxu0 0.0
    %784 = vmatpush1.xpose.msra.mxu0 0.0
    %785 = vmatprep.subr.mxu0 0.0
    %786 = vmatpush1.xpose.msra.mxu0 0.0
    %787 = vmatprep.subr.mxu0 0.0
    %788 = vmatpush1.xpose.msra.mxu0 0.0
    %789 = vmatprep.subr.mxu0 0.0
    %790 = vmatpush1.xpose.msra.mxu0 0.0
    %791 = vmatprep.subr.mxu0 0.0
    %792 = vmatpush1.xpose.msra.mxu0 0.0
    %793 = vmatprep.subr.mxu0 0.0
    %794 = vmatpush1.xpose.msra.mxu0 0.0
    %795 = vmatprep.subr.mxu0 0.0
    %796 = vmatpush1.xpose.msra.mxu0 0.0
    %797 = vmatprep.subr.mxu0 0.0
    %798 = vmatpush1.xpose.msra.mxu0 0.0
    %799 = vmatprep.subr.mxu0 0.0
    %800 = vmatpush1.xpose.msra.mxu0 0.0
    %801 = vmatprep.subr.mxu0 0.0
    %802 = vmatpush1.xpose.msra.mxu0 0.0
    %803 = vmatprep.subr.mxu0 0.0
    %804 = vmatpush1.xpose.msra.mxu0 0.0
    %805 = vmatprep.subr.mxu0 0.0
    %806 = vmatpush1.xpose.msra.mxu0 0.0
    %807 = vmatprep.subr.mxu0 0.0
    %808 = vmatpush1.xpose.msra.mxu0 0.0
    %809 = vmatprep.subr.mxu0 0.0
    %810 = vmatpush1.xpose.msra.mxu0 0.0
    %811 = vmatprep.subr.mxu0 0.0
    %812 = vmatpush1.xpose.msra.mxu0 0.0
    %813 = vmatprep.mubr.f32.mxu0 0.0
    %814 = vmatmul.mubr.f32.gmra.mrb[0].mxu0 %v745
    %v815 = vpop.f32.mrb[0].mxu0
    %v816 = vadd.f32 0.0, %v815
    %v817 = vpop.f32.mrb[0].mxu0
    %818 = vdwg.mxu0
    %v819 = vmul.f32 %v816, 0.35355338
    %v820 = vsel %vm246, %v819, -inf
    %821 = vmax.xlane.f32.xlu0 %v820
    %v822 = vpop.xlane.xlu0 %821
    %v823 = vsub.f32 %v819, %v822
    %v824 = vmul.f32 %v823, 1.442695
    %v825 = vpow.pop %v824
    %v826 = vsel %vm246, %v825, 0.0
    %827 = vadd.xlane.f32.xlu0 %v826
    %v828 = vpop.xlane.xlu0 %827
    %v829 = vrcp.pop %v828
    %v830 = vmul.f32 %v825, %v829
    %831 = vrot.lane.b32.xlu0 %v237, 40
    %v832 = vpop.permute.xlu0 %831
    %v835 = vsel %vm246, %v830, 0
    %837 = vmatprep.subr.mxu0 0.0
    %838 = vmatpush1.msra.mxu0 %v832
    %839 = vmatprep.subr.mxu0 0.0
    %840 = vmatpush1.msra.mxu0 0.0
    %841 = vmatprep.subr.mxu0 0.0
    %842 = vmatpush1.msra.mxu0 0.0
    %843 = vmatprep.subr.mxu0 0.0
    %844 = vmatpush1.msra.mxu0 0.0
    %845 = vmatprep.subr.mxu0 0.0
    %846 = vmatpush1.msra.mxu0 0.0
    %847 = vmatprep.subr.mxu0 0.0
    %848 = vmatpush1.msra.mxu0 0.0
    %849 = vmatprep.subr.mxu0 0.0
    %850 = vmatpush1.msra.mxu0 0.0
    %851 = vmatprep.subr.mxu0 0.0
    %852 = vmatpush1.msra.mxu0 0.0
    %853 = vmatprep.subr.mxu0 0.0
    %854 = vmatpush1.msra.mxu0 0.0
    %855 = vmatprep.subr.mxu0 0.0
    %856 = vmatpush1.msra.mxu0 0.0
    %857 = vmatprep.subr.mxu0 0.0
    %858 = vmatpush1.msra.mxu0 0.0
    %859 = vmatprep.subr.mxu0 0.0
    %860 = vmatpush1.msra.mxu0 0.0
    %861 = vmatprep.subr.mxu0 0.0
    %862 = vmatpush1.msra.mxu0 0.0
    %863 = vmatprep.subr.mxu0 0.0
    %864 = vmatpush1.msra.mxu0 0.0
    %865 = vmatprep.subr.mxu0 0.0
    %866 = vmatpush1.msra.mxu0 0.0
    %867 = vmatprep.subr.mxu0 0.0
    %868 = vmatpush1.msra.mxu0 0.0
    %869 = vmatprep.subr.mxu0 0.0
    %870 = vmatpush1.msra.mxu0 0.0
    %871 = vmatprep.subr.mxu0 0.0
    %872 = vmatpush1.msra.mxu0 0.0
    %873 = vmatprep.subr.mxu0 0.0
    %874 = vmatpush1.msra.mxu0 0.0
    %875 = vmatprep.subr.mxu0 0.0
    %876 = vmatpush1.msra.mxu0 0.0
    %877 = vmatprep.subr.mxu0 0.0
    %878 = vmatpush1.msra.mxu0 0.0
    %879 = vmatprep.subr.mxu0 0.0
    %880 = vmatpush1.msra.mxu0 0.0
    %881 = vmatprep.subr.mxu0 0.0
    %882 = vmatpush1.msra.mxu0 0.0
    %883 = vmatprep.subr.mxu0 0.0
    %884 = vmatpush1.msra.mxu0 0.0
    %885 = vmatprep.subr.mxu0 0.0
    %886 = vmatpush1.msra.mxu0 0.0
    %887 = vmatprep.subr.mxu0 0.0
    %888 = vmatpush1.msra.mxu0 0.0
    %889 = vmatprep.subr.mxu0 0.0
    %890 = vmatpush1.msra.mxu0 0.0
    %891 = vmatprep.subr.mxu0 0.0
    %892 = vmatpush1.msra.mxu0 0.0
    %893 = vmatprep.subr.mxu0 0.0
    %894 = vmatpush1.msra.mxu0 0.0
    %895 = vmatprep.subr.mxu0 0.0
    %896 = vmatpush1.msra.mxu0 0.0
    %897 = vmatprep.subr.mxu0 0.0
    %898 = vmatpush1.msra.mxu0 0.0
    %899 = vmatprep.subr.mxu0 0.0
    %900 = vmatpush1.msra.mxu0 0.0
    %901 = vmatprep.mubr.f32.mxu0 0.0
    %902 = vmatmul.mubr.f32.gmra.mrb[0].mxu0 %v835
    %v903 = vpop.f32.mrb[0].mxu0
    %v904 = vadd.f32 0.0, %v903
    %v905 = vpop.f32.mrb[0].mxu0
    %906 = vdwg.mxu0
    %908 = vrot.lane.b32.xlu0 %v572, 8
    %v909 = vpop.permute.xlu0 %908
    %912 = vrot.lane.b32.xlu0 %v738, 16
    %v913 = vpop.permute.xlu0 %912
    %916 = vrot.lane.b32.xlu0 %v904, 24
    %v917 = vpop.permute.xlu0 %916
    %v919 = vsel %vm246, %v406, %v909
    %vm920 = vcmask 130048
    %v921 = vsel %vm920, %v919, %v913
    %vm922 = vcmask 195584
    %v923 = vsel %vm922, %v921, %v917
    %925 = vrot.lane.b32.xlu0 %v240, 96
    %v926 = vpop.permute.xlu0 %925
    %v927 = vsel %vm246, %v240, 0
    %v929 = vsel %vm246, %v926, 0
    %931 = vmatprep.subr.mxu0 0.0
    %932 = vmatpush1.xpose.msra.mxu0 %v929
    %933 = vmatprep.subr.mxu0 0.0
    %934 = vmatpush1.xpose.msra.mxu0 0.0
    %935 = vmatprep.subr.mxu0 0.0
    %936 = vmatpush1.xpose.msra.mxu0 0.0
    %937 = vmatprep.subr.mxu0 0.0
    %938 = vmatpush1.xpose.msra.mxu0 0.0
    %939 = vmatprep.subr.mxu0 0.0
    %940 = vmatpush1.xpose.msra.mxu0 0.0
    %941 = vmatprep.subr.mxu0 0.0
    %942 = vmatpush1.xpose.msra.mxu0 0.0
    %943 = vmatprep.subr.mxu0 0.0
    %944 = vmatpush1.xpose.msra.mxu0 0.0
    %945 = vmatprep.subr.mxu0 0.0
    %946 = vmatpush1.xpose.msra.mxu0 0.0
    %947 = vmatprep.subr.mxu0 0.0
    %948 = vmatpush1.xpose.msra.mxu0 0.0
    %949 = vmatprep.subr.mxu0 0.0
    %950 = vmatpush1.xpose.msra.mxu0 0.0
    %951 = vmatprep.subr.mxu0 0.0
    %952 = vmatpush1.xpose.msra.mxu0 0.0
    %953 = vmatprep.subr.mxu0 0.0
    %954 = vmatpush1.xpose.msra.mxu0 0.0
    %955 = vmatprep.subr.mxu0 0.0
    %956 = vmatpush1.xpose.msra.mxu0 0.0
    %957 = vmatprep.subr.mxu0 0.0
    %958 = vmatpush1.xpose.msra.mxu0 0.0
    %959 = vmatprep.subr.mxu0 0.0
    %960 = vmatpush1.xpose.msra.mxu0 0.0
    %961 = vmatprep.subr.mxu0 0.0
    %962 = vmatpush1.xpose.msra.mxu0 0.0
    %963 = vmatprep.subr.mxu0 0.0
    %964 = vmatpush1.xpose.msra.mxu0 0.0
    %965 = vmatprep.subr.mxu0 0.0
    %966 = vmatpush1.xpose.msra.mxu0 0.0
    %967 = vmatprep.subr.mxu0 0.0
    %968 = vmatpush1.xpose.msra.mxu0 0.0
    %969 = vmatprep.subr.mxu0 0.0
    %970 = vmatpush1.xpose.msra.mxu0 0.0
    %971 = vmatprep.subr.mxu0 0.0
    %972 = vmatpush1.xpose.msra.mxu0 0.0
    %973 = vmatprep.subr.mxu0 0.0
    %974 = vmatpush1.xpose.msra.mxu0 0.0
    %975 = vmatprep.subr.mxu0 0.0
    %976 = vmatpush1.xpose.msra.mxu0 0.0
    %977 = vmatprep.subr.mxu0 0.0
    %978 = vmatpush1.xpose.msra.mxu0 0.0
    %979 = vmatprep.subr.mxu0 0.0
    %980 = vmatpush1.xpose.msra.mxu0 0.0
    %981 = vmatprep.subr.mxu0 0.0
    %982 = vmatpush1.xpose.msra.mxu0 0.0
    %983 = vmatprep.subr.mxu0 0.0
    %984 = vmatpush1.xpose.msra.mxu0 0.0
    %985 = vmatprep.subr.mxu0 0.0
    %986 = vmatpush1.xpose.msra.mxu0 0.0
    %987 = vmatprep.subr.mxu0 0.0
    %988 = vmatpush1.xpose.msra.mxu0 0.0
    %989 = vmatprep.subr.mxu0 0.0
    %990 = vmatpush1.xpose.msra.mxu0 0.0
    %991 = vmatprep.subr.mxu0 0.0
    %992 = vmatpush1.xpose.msra.mxu0 0.0
    %993 = vmatprep.subr.mxu0 0.0
    %994 = vmatpush1.xpose.msra.mxu0 0.0
    %995 = vmatprep.mubr.f32.mxu0 0.0
    %996 = vmatmul.mubr.f32.gmra.mrb[0].mxu0 %v927
    %v997 = vpop.f32.mrb[0].mxu0
    %v998 = vadd.f32 0.0, %v997
    %v999 = vpop.f32.mrb[0].mxu0
    %1000 = vdwg.mxu0
    %v1001 = vmul.f32 %v998, 0.35355338
    %v1002 = vsel %vm246, %v1001, -inf
    %1003 = vmax.xlane.f32.xlu0 %v1002
    %v1004 = vpop.xlane.xlu0 %1003
    %v1005 = vsub.f32 %v1001, %v1004
    %v1006 = vmul.f32 %v1005, 1.442695
    %v1007 = vpow.pop %v1006
    %v1008 = vsel %vm246, %v1007, 0.0
    %1009 = vadd.xlane.f32.xlu0 %v1008
    %v1010 = vpop.xlane.xlu0 %1009
    %v1011 = vrcp.pop %v1010
    %v1012 = vmul.f32 %v1007, %v1011
    %1013 = vrot.lane.b32.xlu0 %v240, 64
    %v1014 = vpop.permute.xlu0 %1013
    %v1017 = vsel %vm246, %v1012, 0
    %1019 = vmatprep.subr.mxu0 0.0
    %1020 = vmatpush1.msra.mxu0 %v1014
    %1021 = vmatprep.subr.mxu0 0.0
    %1022 = vmatpush1.msra.mxu0 0.0
    %1023 = vmatprep.subr.mxu0 0.0
    %1024 = vmatpush1.msra.mxu0 0.0
    %1025 = vmatprep.subr.mxu0 0.0
    %1026 = vmatpush1.msra.mxu0 0.0
    %1027 = vmatprep.subr.mxu0 0.0
    %1028 = vmatpush1.msra.mxu0 0.0
    %1029 = vmatprep.subr.mxu0 0.0
    %1030 = vmatpush1.msra.mxu0 0.0
    %1031 = vmatprep.subr.mxu0 0.0
    %1032 = vmatpush1.msra.mxu0 0.0
    %1033 = vmatprep.subr.mxu0 0.0
    %1034 = vmatpush1.msra.mxu0 0.0
    %1035 = vmatprep.subr.mxu0 0.0
    %1036 = vmatpush1.msra.mxu0 0.0
    %1037 = vmatprep.subr.mxu0 0.0
    %1038 = vmatpush1.msra.mxu0 0.0
    %1039 = vmatprep.subr.mxu0 0.0
    %1040 = vmatpush1.msra.mxu0 0.0
    %1041 = vmatprep.subr.mxu0 0.0
    %1042 = vmatpush1.msra.mxu0 0.0
    %1043 = vmatprep.subr.mxu0 0.0
    %1044 = vmatpush1.msra.mxu0 0.0
    %1045 = vmatprep.subr.mxu0 0.0
    %1046 = vmatpush1.msra.mxu0 0.0
    %1047 = vmatprep.subr.mxu0 0.0
    %1048 = vmatpush1.msra.mxu0 0.0
    %1049 = vmatprep.subr.mxu0 0.0
    %1050 = vmatpush1.msra.mxu0 0.0
    %1051 = vmatprep.subr.mxu0 0.0
    %1052 = vmatpush1.msra.mxu0 0.0
    %1053 = vmatprep.subr.mxu0 0.0
    %1054 = vmatpush1.msra.mxu0 0.0
    %1055 = vmatprep.subr.mxu0 0.0
    %1056 = vmatpush1.msra.mxu0 0.0
    %1057 = vmatprep.subr.mxu0 0.0
    %1058 = vmatpush1.msra.mxu0 0.0
    %1059 = vmatprep.subr.mxu0 0.0
    %1060 = vmatpush1.msra.mxu0 0.0
    %1061 = vmatprep.subr.mxu0 0.0
    %1062 = vmatpush1.msra.mxu0 0.0
    %1063 = vmatprep.subr.mxu0 0.0
    %1064 = vmatpush1.msra.mxu0 0.0
    %1065 = vmatprep.subr.mxu0 0.0
    %1066 = vmatpush1.msra.mxu0 0.0
    %1067 = vmatprep.subr.mxu0 0.0
    %1068 = vmatpush1.msra.mxu0 0.0
    %1069 = vmatprep.subr.mxu0 0.0
    %1070 = vmatpush1.msra.mxu0 0.0
    %1071 = vmatprep.subr.mxu0 0.0
    %1072 = vmatpush1.msra.mxu0 0.0
    %1073 = vmatprep.subr.mxu0 0.0
    %1074 = vmatpush1.msra.mxu0 0.0
    %1075 = vmatprep.subr.mxu0 0.0
    %1076 = vmatpush1.msra.mxu0 0.0
    %1077 = vmatprep.subr.mxu0 0.0
    %1078 = vmatpush1.msra.mxu0 0.0
    %1079 = vmatprep.subr.mxu0 0.0
    %1080 = vmatpush1.msra.mxu0 0.0
    %1081 = vmatprep.subr.mxu0 0.0
    %1082 = vmatpush1.msra.mxu0 0.0
    %1083 = vmatprep.mubr.f32.mxu0 0.0
    %1084 = vmatmul.mubr.f32.gmra.mrb[0].mxu0 %v1017
    %v1085 = vpop.f32.mrb[0].mxu0
    %v1086 = vadd.f32 0.0, %v1085
    %v1087 = vpop.f32.mrb[0].mxu0
    %1088 = vdwg.mxu0
    %1089 = vrot.lane.b32.xlu0 %v240, 120
    %v1090 = vpop.permute.xlu0 %1089
    %1091 = vrot.lane.b32.xlu0 %v240, 88
    %v1092 = vpop.permute.xlu0 %1091
    %v1093 = vsel %vm246, %v1090, 0
    %v1095 = vsel %vm246, %v1092, 0
    %1097 = vmatprep.subr.mxu0 0.0
    %1098 = vmatpush1.xpose.msra.mxu0 %v1095
    %1099 = vmatprep.subr.mxu0 0.0
    %1100 = vmatpush1.xpose.msra.mxu0 0.0
    %1101 = vmatprep.subr.mxu0 0.0
    %1102 = vmatpush1.xpose.msra.mxu0 0.0
    %1103 = vmatprep.subr.mxu0 0.0
    %1104 = vmatpush1.xpose.msra.mxu0 0.0
    %1105 = vmatprep.subr.mxu0 0.0
    %1106 = vmatpush1.xpose.msra.mxu0 0.0
    %1107 = vmatprep.subr.mxu0 0.0
    %1108 = vmatpush1.xpose.msra.mxu0 0.0
    %1109 = vmatprep.subr.mxu0 0.0
    %1110 = vmatpush1.xpose.msra.mxu0 0.0
    %1111 = vmatprep.subr.mxu0 0.0
    %1112 = vmatpush1.xpose.msra.mxu0 0.0
    %1113 = vmatprep.subr.mxu0 0.0
    %1114 = vmatpush1.xpose.msra.mxu0 0.0
    %1115 = vmatprep.subr.mxu0 0.0
    %1116 = vmatpush1.xpose.msra.mxu0 0.0
    %1117 = vmatprep.subr.mxu0 0.0
    %1118 = vmatpush1.xpose.msra.mxu0 0.0
    %1119 = vmatprep.subr.mxu0 0.0
    %1120 = vmatpush1.xpose.msra.mxu0 0.0
    %1121 = vmatprep.subr.mxu0 0.0
    %1122 = vmatpush1.xpose.msra.mxu0 0.0
    %1123 = vmatprep.subr.mxu0 0.0
    %1124 = vmatpush1.xpose.msra.mxu0 0.0
    %1125 = vmatprep.subr.mxu0 0.0
    %1126 = vmatpush1.xpose.msra.mxu0 0.0
    %1127 = vmatprep.subr.mxu0 0.0
    %1128 = vmatpush1.xpose.msra.mxu0 0.0
    %1129 = vmatprep.subr.mxu0 0.0
    %1130 = vmatpush1.xpose.msra.mxu0 0.0
    %1131 = vmatprep.subr.mxu0 0.0
    %1132 = vmatpush1.xpose.msra.mxu0 0.0
    %1133 = vmatprep.subr.mxu0 0.0
    %1134 = vmatpush1.xpose.msra.mxu0 0.0
    %1135 = vmatprep.subr.mxu0 0.0
    %1136 = vmatpush1.xpose.msra.mxu0 0.0
    %1137 = vmatprep.subr.mxu0 0.0
    %1138 = vmatpush1.xpose.msra.mxu0 0.0
    %1139 = vmatprep.subr.mxu0 0.0
    %1140 = vmatpush1.xpose.msra.mxu0 0.0
    %1141 = vmatprep.subr.mxu0 0.0
    %1142 = vmatpush1.xpose.msra.mxu0 0.0
    %1143 = vmatprep.subr.mxu0 0.0
    %1144 = vmatpush1.xpose.msra.mxu0 0.0
    %1145 = vmatprep.subr.mxu0 0.0
    %1146 = vmatpush1.xpose.msra.mxu0 0.0
    %1147 = vmatprep.subr.mxu0 0.0
    %1148 = vmatpush1.xpose.msra.mxu0 0.0
    %1149 = vmatprep.subr.mxu0 0.0
    %1150 = vmatpush1.xpose.msra.mxu0 0.0
    %1151 = vmatprep.subr.mxu0 0.0
    %1152 = vmatpush1.xpose.msra.mxu0 0.0
    %1153 = vmatprep.subr.mxu0 0.0
    %1154 = vmatpush1.xpose.msra.mxu0 0.0
    %1155 = vmatprep.subr.mxu0 0.0
    %1156 = vmatpush1.xpose.msra.mxu0 0.0
    %1157 = vmatprep.subr.mxu0 0.0
    %1158 = vmatpush1.xpose.msra.mxu0 0.0
    %1159 = vmatprep.subr.mxu0 0.0
    %1160 = vmatpush1.xpose.msra.mxu0 0.0
    %1161 = vmatprep.mubr.f32.mxu0 0.0
    %1162 = vmatmul.mubr.f32.gmra.mrb[0].mxu0 %v1093
    %v1163 = vpop.f32.mrb[0].mxu0
    %v1164 = vadd.f32 0.0, %v1163
    %v1165 = vpop.f32.mrb[0].mxu0
    %1166 = vdwg.mxu0
    %v1167 = vmul.f32 %v1164, 0.35355338
    %v1168 = vsel %vm246, %v1167, -inf
    %1169 = vmax.xlane.f32.xlu0 %v1168
    %v1170 = vpop.xlane.xlu0 %1169
    %v1171 = vsub.f32 %v1167, %v1170
    %v1172 = vmul.f32 %v1171, 1.442695
    %v1173 = vpow.pop %v1172
    %v1174 = vsel %vm246, %v1173, 0.0
    %1175 = vadd.xlane.f32.xlu0 %v1174
    %v1176 = vpop.xlane.xlu0 %1175
    %v1177 = vrcp.pop %v1176
    %v1178 = vmul.f32 %v1173, %v1177
    %1179 = vrot.lane.b32.xlu0 %v240, 56
    %v1180 = vpop.permute.xlu0 %1179
    %v1183 = vsel %vm246, %v1178, 0
    %1185 = vmatprep.subr.mxu0 0.0
    %1186 = vmatpush1.msra.mxu0 %v1180
    %1187 = vmatprep.subr.mxu0 0.0
    %1188 = vmatpush1.msra.mxu0 0.0
    %1189 = vmatprep.subr.mxu0 0.0
    %1190 = vmatpush1.msra.mxu0 0.0
    %1191 = vmatprep.subr.mxu0 0.0
    %1192 = vmatpush1.msra.mxu0 0.0
    %1193 = vmatprep.subr.mxu0 0.0
    %1194 = vmatpush1.msra.mxu0 0.0
    %1195 = vmatprep.subr.mxu0 0.0
    %1196 = vmatpush1.msra.mxu0 0.0
    %1197 = vmatprep.subr.mxu0 0.0
    %1198 = vmatpush1.msra.mxu0 0.0
    %1199 = vmatprep.subr.mxu0 0.0
    %1200 = vmatpush1.msra.mxu0 0.0
    %1201 = vmatprep.subr.mxu0 0.0
    %1202 = vmatpush1.msra.mxu0 0.0
    %1203 = vmatprep.subr.mxu0 0.0
    %1204 = vmatpush1.msra.mxu0 0.0
    %1205 = vmatprep.subr.mxu0 0.0
    %1206 = vmatpush1.msra.mxu0 0.0
    %1207 = vmatprep.subr.mxu0 0.0
    %1208 = vmatpush1.msra.mxu0 0.0
    %1209 = vmatprep.subr.mxu0 0.0
    %1210 = vmatpush1.msra.mxu0 0.0
    %1211 = vmatprep.subr.mxu0 0.0
    %1212 = vmatpush1.msra.mxu0 0.0
    %1213 = vmatprep.subr.mxu0 0.0
    %1214 = vmatpush1.msra.mxu0 0.0
    %1215 = vmatprep.subr.mxu0 0.0
    %1216 = vmatpush1.msra.mxu0 0.0
    %1217 = vmatprep.subr.mxu0 0.0
    %1218 = vmatpush1.msra.mxu0 0.0
    %1219 = vmatprep.subr.mxu0 0.0
    %1220 = vmatpush1.msra.mxu0 0.0
    %1221 = vmatprep.subr.mxu0 0.0
    %1222 = vmatpush1.msra.mxu0 0.0
    %1223 = vmatprep.subr.mxu0 0.0
    %1224 = vmatpush1.msra.mxu0 0.0
    %1225 = vmatprep.subr.mxu0 0.0
    %1226 = vmatpush1.msra.mxu0 0.0
    %1227 = vmatprep.subr.mxu0 0.0
    %1228 = vmatpush1.msra.mxu0 0.0
    %1229 = vmatprep.subr.mxu0 0.0
    %1230 = vmatpush1.msra.mxu0 0.0
    %1231 = vmatprep.subr.mxu0 0.0
    %1232 = vmatpush1.msra.mxu0 0.0
    %1233 = vmatprep.subr.mxu0 0.0
    %1234 = vmatpush1.msra.mxu0 0.0
    %1235 = vmatprep.subr.mxu0 0.0
    %1236 = vmatpush1.msra.mxu0 0.0
    %1237 = vmatprep.subr.mxu0 0.0
    %1238 = vmatpush1.msra.mxu0 0.0
    %1239 = vmatprep.subr.mxu0 0.0
    %1240 = vmatpush1.msra.mxu0 0.0
    %1241 = vmatprep.subr.mxu0 0.0
    %1242 = vmatpush1.msra.mxu0 0.0
    %1243 = vmatprep.subr.mxu0 0.0
    %1244 = vmatpush1.msra.mxu0 0.0
    %1245 = vmatprep.subr.mxu0 0.0
    %1246 = vmatpush1.msra.mxu0 0.0
    %1247 = vmatprep.subr.mxu0 0.0
    %1248 = vmatpush1.msra.mxu0 0.0
    %1249 = vmatprep.mubr.f32.mxu0 0.0
    %1250 = vmatmul.mubr.f32.gmra.mrb[0].mxu0 %v1183
    %v1251 = vpop.f32.mrb[0].mxu0
    %v1252 = vadd.f32 0.0, %v1251
    %v1253 = vpop.f32.mrb[0].mxu0
    %1254 = vdwg.mxu0
    %1255 = vrot.lane.b32.xlu0 %v240, 112
    %v1256 = vpop.permute.xlu0 %1255
    %1257 = vrot.lane.b32.xlu0 %v240, 80
    %v1258 = vpop.permute.xlu0 %1257
    %v1259 = vsel %vm246, %v1256, 0
    %v1261 = vsel %vm246, %v1258, 0
    %1263 = vmatprep.subr.mxu0 0.0
    %1264 = vmatpush1.xpose.msra.mxu0 %v1261
    %1265 = vmatprep.subr.mxu0 0.0
    %1266 = vmatpush1.xpose.msra.mxu0 0.0
    %1267 = vmatprep.subr.mxu0 0.0
    %1268 = vmatpush1.xpose.msra.mxu0 0.0
    %1269 = vmatprep.subr.mxu0 0.0
    %1270 = vmatpush1.xpose.msra.mxu0 0.0
    %1271 = vmatprep.subr.mxu0 0.0
    %1272 = vmatpush1.xpose.msra.mxu0 0.0
    %1273 = vmatprep.subr.mxu0 0.0
    %1274 = vmatpush1.xpose.msra.mxu0 0.0
    %1275 = vmatprep.subr.mxu0 0.0
    %1276 = vmatpush1.xpose.msra.mxu0 0.0
    %1277 = vmatprep.subr.mxu0 0.0
    %1278 = vmatpush1.xpose.msra.mxu0 0.0
    %1279 = vmatprep.subr.mxu0 0.0
    %1280 = vmatpush1.xpose.msra.mxu0 0.0
    %1281 = vmatprep.subr.mxu0 0.0
    %1282 = vmatpush1.xpose.msra.mxu0 0.0
    %1283 = vmatprep.subr.mxu0 0.0
    %1284 = vmatpush1.xpose.msra.mxu0 0.0
    %1285 = vmatprep.subr.mxu0 0.0
    %1286 = vmatpush1.xpose.msra.mxu0 0.0
    %1287 = vmatprep.subr.mxu0 0.0
    %1288 = vmatpush1.xpose.msra.mxu0 0.0
    %1289 = vmatprep.subr.mxu0 0.0
    %1290 = vmatpush1.xpose.msra.mxu0 0.0
    %1291 = vmatprep.subr.mxu0 0.0
    %1292 = vmatpush1.xpose.msra.mxu0 0.0
    %1293 = vmatprep.subr.mxu0 0.0
    %1294 = vmatpush1.xpose.msra.mxu0 0.0
    %1295 = vmatprep.subr.mxu0 0.0
    %1296 = vmatpush1.xpose.msra.mxu0 0.0
    %1297 = vmatprep.subr.mxu0 0.0
    %1298 = vmatpush1.xpose.msra.mxu0 0.0
    %1299 = vmatprep.subr.mxu0 0.0
    %1300 = vmatpush1.xpose.msra.mxu0 0.0
    %1301 = vmatprep.subr.mxu0 0.0
    %1302 = vmatpush1.xpose.msra.mxu0 0.0
    %1303 = vmatprep.subr.mxu0 0.0
    %1304 = vmatpush1.xpose.msra.mxu0 0.0
    %1305 = vmatprep.subr.mxu0 0.0
    %1306 = vmatpush1.xpose.msra.mxu0 0.0
    %1307 = vmatprep.subr.mxu0 0.0
    %1308 = vmatpush1.xpose.msra.mxu0 0.0
    %1309 = vmatprep.subr.mxu0 0.0
    %1310 = vmatpush1.xpose.msra.mxu0 0.0
    %1311 = vmatprep.subr.mxu0 0.0
    %1312 = vmatpush1.xpose.msra.mxu0 0.0
    %1313 = vmatprep.subr.mxu0 0.0
    %1314 = vmatpush1.xpose.msra.mxu0 0.0
    %1315 = vmatprep.subr.mxu0 0.0
    %1316 = vmatpush1.xpose.msra.mxu0 0.0
    %1317 = vmatprep.subr.mxu0 0.0
    %1318 = vmatpush1.xpose.msra.mxu0 0.0
    %1319 = vmatprep.subr.mxu0 0.0
    %1320 = vmatpush1.xpose.msra.mxu0 0.0
    %1321 = vmatprep.subr.mxu0 0.0
    %1322 = vmatpush1.xpose.msra.mxu0 0.0
    %1323 = vmatprep.subr.mxu0 0.0
    %1324 = vmatpush1.xpose.msra.mxu0 0.0
    %1325 = vmatprep.subr.mxu0 0.0
    %1326 = vmatpush1.xpose.msra.mxu0 0.0
    %1327 = vmatprep.mubr.f32.mxu0 0.0
    %1328 = vmatmul.mubr.f32.gmra.mrb[0].mxu0 %v1259
    %v1329 = vpop.f32.mrb[0].mxu0
    %v1330 = vadd.f32 0.0, %v1329
    %v1331 = vpop.f32.mrb[0].mxu0
    %1332 = vdwg.mxu0
    %v1333 = vmul.f32 %v1330, 0.35355338
    %v1334 = vsel %vm246, %v1333, -inf
    %1335 = vmax.xlane.f32.xlu0 %v1334
    %v1336 = vpop.xlane.xlu0 %1335
    %v1337 = vsub.f32 %v1333, %v1336
    %v1338 = vmul.f32 %v1337, 1.442695
    %v1339 = vpow.pop %v1338
    %v1340 = vsel %vm246, %v1339, 0.0
    %1341 = vadd.xlane.f32.xlu0 %v1340
    %v1342 = vpop.xlane.xlu0 %1341
    %v1343 = vrcp.pop %v1342
    %v1344 = vmul.f32 %v1339, %v1343
    %1345 = vrot.lane.b32.xlu0 %v240, 48
    %v1346 = vpop.permute.xlu0 %1345
    %v1349 = vsel %vm246, %v1344, 0
    %1351 = vmatprep.subr.mxu0 0.0
    %1352 = vmatpush1.msra.mxu0 %v1346
    %1353 = vmatprep.subr.mxu0 0.0
    %1354 = vmatpush1.msra.mxu0 0.0
    %1355 = vmatprep.subr.mxu0 0.0
    %1356 = vmatpush1.msra.mxu0 0.0
    %1357 = vmatprep.subr.mxu0 0.0
    %1358 = vmatpush1.msra.mxu0 0.0
    %1359 = vmatprep.subr.mxu0 0.0
    %1360 = vmatpush1.msra.mxu0 0.0
    %1361 = vmatprep.subr.mxu0 0.0
    %1362 = vmatpush1.msra.mxu0 0.0
    %1363 = vmatprep.subr.mxu0 0.0
    %1364 = vmatpush1.msra.mxu0 0.0
    %1365 = vmatprep.subr.mxu0 0.0
    %1366 = vmatpush1.msra.mxu0 0.0
    %1367 = vmatprep.subr.mxu0 0.0
    %1368 = vmatpush1.msra.mxu0 0.0
    %1369 = vmatprep.subr.mxu0 0.0
    %1370 = vmatpush1.msra.mxu0 0.0
    %1371 = vmatprep.subr.mxu0 0.0
    %1372 = vmatpush1.msra.mxu0 0.0
    %1373 = vmatprep.subr.mxu0 0.0
    %1374 = vmatpush1.msra.mxu0 0.0
    %1375 = vmatprep.subr.mxu0 0.0
    %1376 = vmatpush1.msra.mxu0 0.0
    %1377 = vmatprep.subr.mxu0 0.0
    %1378 = vmatpush1.msra.mxu0 0.0
    %1379 = vmatprep.subr.mxu0 0.0
    %1380 = vmatpush1.msra.mxu0 0.0
    %1381 = vmatprep.subr.mxu0 0.0
    %1382 = vmatpush1.msra.mxu0 0.0
    %1383 = vmatprep.subr.mxu0 0.0
    %1384 = vmatpush1.msra.mxu0 0.0
    %1385 = vmatprep.subr.mxu0 0.0
    %1386 = vmatpush1.msra.mxu0 0.0
    %1387 = vmatprep.subr.mxu0 0.0
    %1388 = vmatpush1.msra.mxu0 0.0
    %1389 = vmatprep.subr.mxu0 0.0
    %1390 = vmatpush1.msra.mxu0 0.0
    %1391 = vmatprep.subr.mxu0 0.0
    %1392 = vmatpush1.msra.mxu0 0.0
    %1393 = vmatprep.subr.mxu0 0.0
    %1394 = vmatpush1.msra.mxu0 0.0
    %1395 = vmatprep.subr.mxu0 0.0
    %1396 = vmatpush1.msra.mxu0 0.0
    %1397 = vmatprep.subr.mxu0 0.0
    %1398 = vmatpush1.msra.mxu0 0.0
    %1399 = vmatprep.subr.mxu0 0.0
    %1400 = vmatpush1.msra.mxu0 0.0
    %1401 = vmatprep.subr.mxu0 0.0
    %1402 = vmatpush1.msra.mxu0 0.0
    %1403 = vmatprep.subr.mxu0 0.0
    %1404 = vmatpush1.msra.mxu0 0.0
    %1405 = vmatprep.subr.mxu0 0.0
    %1406 = vmatpush1.msra.mxu0 0.0
    %1407 = vmatprep.subr.mxu0 0.0
    %1408 = vmatpush1.msra.mxu0 0.0
    %1409 = vmatprep.subr.mxu0 0.0
    %1410 = vmatpush1.msra.mxu0 0.0
    %1411 = vmatprep.subr.mxu0 0.0
    %1412 = vmatpush1.msra.mxu0 0.0
    %1413 = vmatprep.subr.mxu0 0.0
    %1414 = vmatpush1.msra.mxu0 0.0
    %1415 = vmatprep.mubr.f32.mxu0 0.0
    %1416 = vmatmul.mubr.f32.gmra.mrb[0].mxu0 %v1349
    %v1417 = vpop.f32.mrb[0].mxu0
    %v1418 = vadd.f32 0.0, %v1417
    %v1419 = vpop.f32.mrb[0].mxu0
    %1420 = vdwg.mxu0
    %1421 = vrot.lane.b32.xlu0 %v240, 104
    %v1422 = vpop.permute.xlu0 %1421
    %1423 = vrot.lane.b32.xlu0 %v240, 72
    %v1424 = vpop.permute.xlu0 %1423
    %v1425 = vsel %vm246, %v1422, 0
    %v1427 = vsel %vm246, %v1424, 0
    %1429 = vmatprep.subr.mxu0 0.0
    %1430 = vmatpush1.xpose.msra.mxu0 %v1427
    %1431 = vmatprep.subr.mxu0 0.0
    %1432 = vmatpush1.xpose.msra.mxu0 0.0
    %1433 = vmatprep.subr.mxu0 0.0
    %1434 = vmatpush1.xpose.msra.mxu0 0.0
    %1435 = vmatprep.subr.mxu0 0.0
    %1436 = vmatpush1.xpose.msra.mxu0 0.0
    %1437 = vmatprep.subr.mxu0 0.0
    %1438 = vmatpush1.xpose.msra.mxu0 0.0
    %1439 = vmatprep.subr.mxu0 0.0
    %1440 = vmatpush1.xpose.msra.mxu0 0.0
    %1441 = vmatprep.subr.mxu0 0.0
    %1442 = vmatpush1.xpose.msra.mxu0 0.0
    %1443 = vmatprep.subr.mxu0 0.0
    %1444 = vmatpush1.xpose.msra.mxu0 0.0
    %1445 = vmatprep.subr.mxu0 0.0
    %1446 = vmatpush1.xpose.msra.mxu0 0.0
    %1447 = vmatprep.subr.mxu0 0.0
    %1448 = vmatpush1.xpose.msra.mxu0 0.0
    %1449 = vmatprep.subr.mxu0 0.0
    %1450 = vmatpush1.xpose.msra.mxu0 0.0
    %1451 = vmatprep.subr.mxu0 0.0
    %1452 = vmatpush1.xpose.msra.mxu0 0.0
    %1453 = vmatprep.subr.mxu0 0.0
    %1454 = vmatpush1.xpose.msra.mxu0 0.0
    %1455 = vmatprep.subr.mxu0 0.0
    %1456 = vmatpush1.xpose.msra.mxu0 0.0
    %1457 = vmatprep.subr.mxu0 0.0
    %1458 = vmatpush1.xpose.msra.mxu0 0.0
    %1459 = vmatprep.subr.mxu0 0.0
    %1460 = vmatpush1.xpose.msra.mxu0 0.0
    %1461 = vmatprep.subr.mxu0 0.0
    %1462 = vmatpush1.xpose.msra.mxu0 0.0
    %1463 = vmatprep.subr.mxu0 0.0
    %1464 = vmatpush1.xpose.msra.mxu0 0.0
    %1465 = vmatprep.subr.mxu0 0.0
    %1466 = vmatpush1.xpose.msra.mxu0 0.0
    %1467 = vmatprep.subr.mxu0 0.0
    %1468 = vmatpush1.xpose.msra.mxu0 0.0
    %1469 = vmatprep.subr.mxu0 0.0
    %1470 = vmatpush1.xpose.msra.mxu0 0.0
    %1471 = vmatprep.subr.mxu0 0.0
    %1472 = vmatpush1.xpose.msra.mxu0 0.0
    %1473 = vmatprep.subr.mxu0 0.0
    %1474 = vmatpush1.xpose.msra.mxu0 0.0
    %1475 = vmatprep.subr.mxu0 0.0
    %1476 = vmatpush1.xpose.msra.mxu0 0.0
    %1477 = vmatprep.subr.mxu0 0.0
    %1478 = vmatpush1.xpose.msra.mxu0 0.0
    %1479 = vmatprep.subr.mxu0 0.0
    %1480 = vmatpush1.xpose.msra.mxu0 0.0
    %1481 = vmatprep.subr.mxu0 0.0
    %1482 = vmatpush1.xpose.msra.mxu0 0.0
    %1483 = vmatprep.subr.mxu0 0.0
    %1484 = vmatpush1.xpose.msra.mxu0 0.0
    %1485 = vmatprep.subr.mxu0 0.0
    %1486 = vmatpush1.xpose.msra.mxu0 0.0
    %1487 = vmatprep.subr.mxu0 0.0
    %1488 = vmatpush1.xpose.msra.mxu0 0.0
    %1489 = vmatprep.subr.mxu0 0.0
    %1490 = vmatpush1.xpose.msra.mxu0 0.0
    %1491 = vmatprep.subr.mxu0 0.0
    %1492 = vmatpush1.xpose.msra.mxu0 0.0
    %1493 = vmatprep.mubr.f32.mxu0 0.0
    %1494 = vmatmul.mubr.f32.gmra.mrb[0].mxu0 %v1425
    %v1495 = vpop.f32.mrb[0].mxu0
    %v1496 = vadd.f32 0.0, %v1495
    %v1497 = vpop.f32.mrb[0].mxu0
    %1498 = vdwg.mxu0
    %v1499 = vmul.f32 %v1496, 0.35355338
    %v1500 = vsel %vm246, %v1499, -inf
    %1501 = vmax.xlane.f32.xlu0 %v1500
    %v1502 = vpop.xlane.xlu0 %1501
    %v1503 = vsub.f32 %v1499, %v1502
    %v1504 = vmul.f32 %v1503, 1.442695
    %v1505 = vpow.pop %v1504
    %v1506 = vsel %vm246, %v1505, 0.0
    %1507 = vadd.xlane.f32.xlu0 %v1506
    %v1508 = vpop.xlane.xlu0 %1507
    %v1509 = vrcp.pop %v1508
    %v1510 = vmul.f32 %v1505, %v1509
    %1511 = vrot.lane.b32.xlu0 %v240, 40
    %v1512 = vpop.permute.xlu0 %1511
    %v1515 = vsel %vm246, %v1510, 0
    %1517 = vmatprep.subr.mxu0 0.0
    %1518 = vmatpush1.msra.mxu0 %v1512
    %1519 = vmatprep.subr.mxu0 0.0
    %1520 = vmatpush1.msra.mxu0 0.0
    %1521 = vmatprep.subr.mxu0 0.0
    %1522 = vmatpush1.msra.mxu0 0.0
    %1523 = vmatprep.subr.mxu0 0.0
    %1524 = vmatpush1.msra.mxu0 0.0
    %1525 = vmatprep.subr.mxu0 0.0
    %1526 = vmatpush1.msra.mxu0 0.0
    %1527 = vmatprep.subr.mxu0 0.0
    %1528 = vmatpush1.msra.mxu0 0.0
    %1529 = vmatprep.subr.mxu0 0.0
    %1530 = vmatpush1.msra.mxu0 0.0
    %1531 = vmatprep.subr.mxu0 0.0
    %1532 = vmatpush1.msra.mxu0 0.0
    %1533 = vmatprep.subr.mxu0 0.0
    %1534 = vmatpush1.msra.mxu0 0.0
    %1535 = vmatprep.subr.mxu0 0.0
    %1536 = vmatpush1.msra.mxu0 0.0
    %1537 = vmatprep.subr.mxu0 0.0
    %1538 = vmatpush1.msra.mxu0 0.0
    %1539 = vmatprep.subr.mxu0 0.0
    %1540 = vmatpush1.msra.mxu0 0.0
    %1541 = vmatprep.subr.mxu0 0.0
    %1542 = vmatpush1.msra.mxu0 0.0
    %1543 = vmatprep.subr.mxu0 0.0
    %1544 = vmatpush1.msra.mxu0 0.0
    %1545 = vmatprep.subr.mxu0 0.0
    %1546 = vmatpush1.msra.mxu0 0.0
    %1547 = vmatprep.subr.mxu0 0.0
    %1548 = vmatpush1.msra.mxu0 0.0
    %1549 = vmatprep.subr.mxu0 0.0
    %1550 = vmatpush1.msra.mxu0 0.0
    %1551 = vmatprep.subr.mxu0 0.0
    %1552 = vmatpush1.msra.mxu0 0.0
    %1553 = vmatprep.subr.mxu0 0.0
    %1554 = vmatpush1.msra.mxu0 0.0
    %1555 = vmatprep.subr.mxu0 0.0
    %1556 = vmatpush1.msra.mxu0 0.0
    %1557 = vmatprep.subr.mxu0 0.0
    %1558 = vmatpush1.msra.mxu0 0.0
    %1559 = vmatprep.subr.mxu0 0.0
    %1560 = vmatpush1.msra.mxu0 0.0
    %1561 = vmatprep.subr.mxu0 0.0
    %1562 = vmatpush1.msra.mxu0 0.0
    %1563 = vmatprep.subr.mxu0 0.0
    %1564 = vmatpush1.msra.mxu0 0.0
    %1565 = vmatprep.subr.mxu0 0.0
    %1566 = vmatpush1.msra.mxu0 0.0
    %1567 = vmatprep.subr.mxu0 0.0
    %1568 = vmatpush1.msra.mxu0 0.0
    %1569 = vmatprep.subr.mxu0 0.0
    %1570 = vmatpush1.msra.mxu0 0.0
    %1571 = vmatprep.subr.mxu0 0.0
    %1572 = vmatpush1.msra.mxu0 0.0
    %1573 = vmatprep.subr.mxu0 0.0
    %1574 = vmatpush1.msra.mxu0 0.0
    %1575 = vmatprep.subr.mxu0 0.0
    %1576 = vmatpush1.msra.mxu0 0.0
    %1577 = vmatprep.subr.mxu0 0.0
    %1578 = vmatpush1.msra.mxu0 0.0
    %1579 = vmatprep.subr.mxu0 0.0
    %1580 = vmatpush1.msra.mxu0 0.0
    %1581 = vmatprep.mubr.f32.mxu0 0.0
    %1582 = vmatmul.mubr.f32.gmra.mrb[0].mxu0 %v1515
    %v1583 = vpop.f32.mrb[0].mxu0
    %v1584 = vadd.f32 0.0, %v1583
    %v1585 = vpop.f32.mrb[0].mxu0
    %1586 = vdwg.mxu0
    %1588 = vrot.lane.b32.xlu0 %v1252, 8
    %v1589 = vpop.permute.xlu0 %1588
    %1592 = vrot.lane.b32.xlu0 %v1418, 16
    %v1593 = vpop.permute.xlu0 %1592
    %1596 = vrot.lane.b32.xlu0 %v1584, 24
    %v1597 = vpop.permute.xlu0 %1596
    %v1599 = vsel %vm246, %v1086, %v1589
    %v1600 = vsel %vm920, %v1599, %v1593
    %v1601 = vsel %vm922, %v1600, %v1597
    %v1602 = vld [vmem:[%s5] sm:$0xff]
    %v1603 = vld [vmem:[%s5 + $0x8] sm:$0xff]
    %v1604 = vld [vmem:[%s5 + $0x10] sm:$0xff]
    %v1605 = vld [vmem:[%s5 + $0x18] sm:$0xff]
    %v1606 = vpack.c.bf16 %v1601, %v923
    %v1607 = vpack.c.bf16 %v1603, %v1602
    %v1608 = vpack.c.bf16 %v1605, %v1604
    %v1609 = vld [vmem:[%s6] sm:$0x1]
    %v1611 = vlaneseq
    %v1612 = vshrl.u32 %v1611, 7
    %v1613 = vsub.s32 0, %v1612
    %v1614 = vrot.slane %v1609, %v1613
    %v1617 = vsel %vm198, %v1606, 0
    %1619 = vmatprep.subr.bf16.mxu0 0
    %1620 = vmatpush1.bf16.msra.mxu0 %v1607
    %1621 = vmatprep.subr.bf16.mxu0 0
    %1622 = vmatpush1.bf16.msra.mxu0 %v1608
    %1623 = vmatprep.subr.bf16.mxu0 0
    %1624 = vmatpush1.bf16.msra.mxu0 0
    %1625 = vmatprep.subr.bf16.mxu0 0
    %1626 = vmatpush1.bf16.msra.mxu0 0
    %1627 = vmatprep.subr.bf16.mxu0 0
    %1628 = vmatpush1.bf16.msra.mxu0 0
    %1629 = vmatprep.subr.bf16.mxu0 0
    %1630 = vmatpush1.bf16.msra.mxu0 0
    %1631 = vmatprep.subr.bf16.mxu0 0
    %1632 = vmatpush1.bf16.msra.mxu0 0
    %1633 = vmatprep.subr.bf16.mxu0 0
    %1634 = vmatpush1.bf16.msra.mxu0 0
    %1635 = vmatprep.subr.bf16.mxu0 0
    %1636 = vmatpush1.bf16.msra.mxu0 0
    %1637 = vmatprep.subr.bf16.mxu0 0
    %1638 = vmatpush1.bf16.msra.mxu0 0
    %1639 = vmatprep.subr.bf16.mxu0 0
    %1640 = vmatpush1.bf16.msra.mxu0 0
    %1641 = vmatprep.subr.bf16.mxu0 0
    %1642 = vmatpush1.bf16.msra.mxu0 0
    %1643 = vmatprep.subr.bf16.mxu0 0
    %1644 = vmatpush1.bf16.msra.mxu0 0
    %1645 = vmatprep.subr.bf16.mxu0 0
    %1646 = vmatpush1.bf16.msra.mxu0 0
    %1647 = vmatprep.subr.bf16.mxu0 0
    %1648 = vmatpush1.bf16.msra.mxu0 0
    %1649 = vmatprep.subr.bf16.mxu0 0
    %1650 = vmatpush1.bf16.msra.mxu0 0
    %1651 = vmatprep.mubr.bf16.mxu0 0
    %1652 = vmatmul.mubr.bf16.gmra.mrb[0].mxu0 %v1617
    %v1653 = vpop.f32.mrb[0].mxu0
    %v1654 = vadd.f32 %v1614, %v1653
    %v1655 = vpop.f32.mrb[0].mxu0
    %v1656 = vpop.f32.mrb[0].mxu0
    %v1657 = vadd.f32 %v1614, %v1656
    %v1658 = vpop.f32.mrb[0].mxu0
    %1659 = vdwg.mxu0
    %v1660 = vadd.f32 %v182, %v1654
    %v1661 = vadd.f32 %v183, %v1657
    %v1662 = vld [vmem:[%s7] sm:$0x1]
    %v1663 = vld [vmem:[%s8] sm:$0x1]
    %v1664 = vsel %vm198, %v1660, 0.0
    %1665 = vadd.xlane.f32.xlu0 %v1664
    %v1666 = vpop.xlane.xlu0 %1665
    %v1667 = vsel %vm198, %v1661, 0.0
    %1668 = vadd.xlane.f32.xlu0 %v1667
    %v1669 = vpop.xlane.xlu0 %1668
    %v1670 = vrcp.pop 32.0
    %v1671 = vmul.f32 %v1666, %v1670
    %v1672 = vmul.f32 %v1669, %v1670
    %v1673 = vsub.f32 %v1660, %v1671
    %v1674 = vsub.f32 %v1661, %v1672
    %v1675 = vmul.f32 %v1673, %v1673
    %v1676 = vmul.f32 %v1674, %v1674
    %v1677 = vsel %vm198, %v1675, 0.0
    %1678 = vadd.xlane.f32.xlu0 %v1677
    %v1679 = vpop.xlane.xlu0 %1678
    %v1680 = vsel %vm198, %v1676, 0.0
    %1681 = vadd.xlane.f32.xlu0 %v1680
    %v1682 = vpop.xlane.xlu0 %1681
    %v1683 = vmul.f32 %v1679, %v1670
    %v1684 = vmul.f32 %v1682, %v1670
    %v1685 = vadd.f32 %v1683, 1e-05
    %v1686 = vadd.f32 %v1684, 1e-05
    %v1687 = vrsqrt.pop %v1685
    %v1688 = vrsqrt.pop %v1686
    %v1689 = vmul.f32 %v1673, %v1687
    %v1690 = vmul.f32 %v1674, %v1688
    %v1692 = vlaneseq
    %v1693 = vshrl.u32 %v1692, 7
    %v1694 = vsub.s32 0, %v1693
    %v1695 = vrot.slane %v1662, %v1694
    %v1697 = vmul.f32 %v1689, %v1695
    %v1698 = vmul.f32 %v1690, %v1695
    %v1700 = vlaneseq
    %v1701 = vshrl.u32 %v1700, 7
    %v1702 = vsub.s32 0, %v1701
    %v1703 = vrot.slane %v1663, %v1702
    %v1705 = vadd.f32 %v1697, %v1703
    %v1706 = vadd.f32 %v1698, %v1703
    %v1707 = vld [vmem:[#allocation2] sm:$0xff]
    %v1708 = vld [vmem:[#allocation2 + $0x8] sm:$0xff]
    %v1709 = vld [vmem:[#allocation2 + $0x10] sm:$0xff]
    %v1710 = vld [vmem:[#allocation2 + $0x18] sm:$0xff]
    %v1711 = vpack.c.bf16 %v1706, %v1705
    %v1712 = vpack.c.bf16 %v1708, %v1707
    %v1713 = vpack.c.bf16 %v1710, %v1709
    %v1714 = vld [vmem:[%s10] sm:$0x1]
    %v1716 = vlaneseq
    %v1717 = vshrl.u32 %v1716, 7
    %v1718 = vsub.s32 0, %v1717
    %v1719 = vrot.slane %v1714, %v1718
    %v1722 = vsel %vm198, %v1711, 0
    %1724 = vmatprep.subr.bf16.mxu0 0
    %1725 = vmatpush1.bf16.msra.mxu0 %v1712
    %1726 = vmatprep.subr.bf16.mxu0 0
    %1727 = vmatpush1.bf16.msra.mxu0 %v1713
    %1728 = vmatprep.subr.bf16.mxu0 0
    %1729 = vmatpush1.bf16.msra.mxu0 0
    %1730 = vmatprep.subr.bf16.mxu0 0
    %1731 = vmatpush1.bf16.msra.mxu0 0
    %1732 = vmatprep.subr.bf16.mxu0 0
    %1733 = vmatpush1.bf16.msra.mxu0 0
    %1734 = vmatprep.subr.bf16.mxu0 0
    %1735 = vmatpush1.bf16.msra.mxu0 0
    %1736 = vmatprep.subr.bf16.mxu0 0
    %1737 = vmatpush1.bf16.msra.mxu0 0
    %1738 = vmatprep.subr.bf16.mxu0 0
    %1739 = vmatpush1.bf16.msra.mxu0 0
    %1740 = vmatprep.subr.bf16.mxu0 0
    %1741 = vmatpush1.bf16.msra.mxu0 0
    %1742 = vmatprep.subr.bf16.mxu0 0
    %1743 = vmatpush1.bf16.msra.mxu0 0
    %1744 = vmatprep.subr.bf16.mxu0 0
    %1745 = vmatpush1.bf16.msra.mxu0 0
    %1746 = vmatprep.subr.bf16.mxu0 0
    %1747 = vmatpush1.bf16.msra.mxu0 0
    %1748 = vmatprep.subr.bf16.mxu0 0
    %1749 = vmatpush1.bf16.msra.mxu0 0
    %1750 = vmatprep.subr.bf16.mxu0 0
    %1751 = vmatpush1.bf16.msra.mxu0 0
    %1752 = vmatprep.subr.bf16.mxu0 0
    %1753 = vmatpush1.bf16.msra.mxu0 0
    %1754 = vmatprep.subr.bf16.mxu0 0
    %1755 = vmatpush1.bf16.msra.mxu0 0
    %1756 = vmatprep.mubr.bf16.mxu0 0
    %1757 = vmatmul.mubr.bf16.gmra.mrb[0].mxu0 %v1722
    %v1758 = vpop.f32.mrb[0].mxu0
    %v1759 = vadd.f32 %v1719, %v1758
    %v1760 = vpop.f32.mrb[0].mxu0
    %v1761 = vpop.f32.mrb[0].mxu0
    %v1762 = vadd.f32 %v1719, %v1761
    %v1763 = vpop.f32.mrb[0].mxu0
    %1764 = vdwg.mxu0
    %v1765 = vmax.f32 %v1759, 0.0
    %v1766 = vmax.f32 %v1762, 0.0
    %v1767 = vld [vmem:[%s11] sm:$0xff]
    %v1768 = vld [vmem:[%s11 + $0x8] sm:$0xff]
    %v1769 = vld [vmem:[%s11 + $0x10] sm:$0xff]
    %v1770 = vld [vmem:[%s11 + $0x18] sm:$0xff]
    %v1771 = vld [vmem:[%s11 + $0x20] sm:$0xff]
    %v1772 = vld [vmem:[%s11 + $0x28] sm:$0xff]
    %v1773 = vld [vmem:[%s11 + $0x30] sm:$0xff]
    %v1774 = vld [vmem:[%s11 + $0x38] sm:$0xff]
    %v1775 = vpack.c.bf16 %v1766, %v1765
    %v1776 = vpack.c.bf16 %v1768, %v1767
    %v1777 = vpack.c.bf16 %v1770, %v1769
    %v1778 = vpack.c.bf16 %v1772, %v1771
    %v1779 = vpack.c.bf16 %v1774, %v1773
    %v1781 = vsel %vm96, %v1775, 0
    %1783 = vmatprep.subr.bf16.mxu0 0
    %1784 = vmatpush1.bf16.msra.mxu0 %v1776
    %1785 = vmatprep.subr.bf16.mxu0 0
    %1786 = vmatpush1.bf16.msra.mxu0 %v1777
    %1787 = vmatprep.subr.bf16.mxu0 0
    %1788 = vmatpush1.bf16.msra.mxu0 %v1778
    %1789 = vmatprep.subr.bf16.mxu0 0
    %1790 = vmatpush1.bf16.msra.mxu0 %v1779
    %1791 = vmatprep.subr.bf16.mxu0 0
    %1792 = vmatpush1.bf16.msra.mxu0 0
    %1793 = vmatprep.subr.bf16.mxu0 0
    %1794 = vmatpush1.bf16.msra.mxu0 0
    %1795 = vmatprep.subr.bf16.mxu0 0
    %1796 = vmatpush1.bf16.msra.mxu0 0
    %1797 = vmatprep.subr.bf16.mxu0 0
    %1798 = vmatpush1.bf16.msra.mxu0 0
    %1799 = vmatprep.subr.bf16.mxu0 0
    %1800 = vmatpush1.bf16.msra.mxu0 0
    %1801 = vmatprep.subr.bf16.mxu0 0
    %1802 = vmatpush1.bf16.msra.mxu0 0
    %1803 = vmatprep.subr.bf16.mxu0 0
    %1804 = vmatpush1.bf16.msra.mxu0 0
    %1805 = vmatprep.subr.bf16.mxu0 0
    %1806 = vmatpush1.bf16.msra.mxu0 0
    %1807 = vmatprep.subr.bf16.mxu0 0
    %1808 = vmatpush1.bf16.msra.mxu0 0
    %1809 = vmatprep.subr.bf16.mxu0 0
    %1810 = vmatpush1.bf16.msra.mxu0 0
    %1811 = vmatprep.subr.bf16.mxu0 0
    %1812 = vmatpush1.bf16.msra.mxu0 0
    %1813 = vmatprep.subr.bf16.mxu0 0
    %1814 = vmatpush1.bf16.msra.mxu0 0
    %1815 = vmatprep.mubr.bf16.mxu0 0
    %1816 = vmatmul.mubr.bf16.gmra.mrb[0].mxu0 %v1781
    %v1817 = vpop.f32.mrb[0].mxu0
    %v1818 = vadd.f32 0.0, %v1817
    %v1819 = vpop.f32.mrb[0].mxu0
    %v1820 = vpop.f32.mrb[0].mxu0
    %v1821 = vadd.f32 0.0, %v1820
    %v1822 = vpop.f32.mrb[0].mxu0
    %1823 = vdwg.mxu0
    %v1824 = vadd.f32 %v1705, %v1818
    %v1825 = vadd.f32 %v1706, %v1821
    %v1826 = vld [vmem:[%s12] sm:$0x1]
    %v1828 = vlaneseq
    %v1829 = vshrl.u32 %v1828, 7
    %v1830 = vsub.s32 0, %v1829
    %v1831 = vrot.slane %v1826, %v1830
    %v1833 = vadd.f32 %v1824, %v1831
    %v1834 = vadd.f32 %v1825, %v1831
    %v1835 = vld [vmem:[%s13] sm:$0x1]
    %v1836 = vld [vmem:[%s14] sm:$0x1]
    %v1837 = vsel %vm198, %v1833, 0.0
    %1838 = vadd.xlane.f32.xlu0 %v1837
    %v1839 = vpop.xlane.xlu0 %1838
    %v1840 = vsel %vm198, %v1834, 0.0
    %1841 = vadd.xlane.f32.xlu0 %v1840
    %v1842 = vpop.xlane.xlu0 %1841
    %v1843 = vmul.f32 %v1839, %v1670
    %v1844 = vmul.f32 %v1842, %v1670
    %v1845 = vsub.f32 %v1833, %v1843
    %v1846 = vsub.f32 %v1834, %v1844
    %v1847 = vmul.f32 %v1845, %v1845
    %v1848 = vmul.f32 %v1846, %v1846
    %v1849 = vsel %vm198, %v1847, 0.0
    %1850 = vadd.xlane.f32.xlu0 %v1849
    %v1851 = vpop.xlane.xlu0 %1850
    %v1852 = vsel %vm198, %v1848, 0.0
    %1853 = vadd.xlane.f32.xlu0 %v1852
    %v1854 = vpop.xlane.xlu0 %1853
    %v1855 = vmul.f32 %v1851, %v1670
    %v1856 = vmul.f32 %v1854, %v1670
    %v1857 = vadd.f32 %v1855, 1e-05
    %v1858 = vadd.f32 %v1856, 1e-05
    %v1859 = vrsqrt.pop %v1857
    %v1860 = vrsqrt.pop %v1858
    %v1861 = vmul.f32 %v1845, %v1859
    %v1862 = vmul.f32 %v1846, %v1860
    %v1864 = vlaneseq
    %v1865 = vshrl.u32 %v1864, 7
    %v1866 = vsub.s32 0, %v1865
    %v1867 = vrot.slane %v1835, %v1866
    %v1869 = vmul.f32 %v1861, %v1867
    %v1870 = vmul.f32 %v1862, %v1867
    %v1872 = vlaneseq
    %v1873 = vshrl.u32 %v1872, 7
    %v1874 = vsub.s32 0, %v1873
    %v1875 = vrot.slane %v1836, %v1874
    %v1877 = vadd.f32 %v1869, %v1875
    %v1878 = vadd.f32 %v1870, %v1875
    %v1879 = vld [vmem:[%s15] sm:$0xff]
    %v1880 = vld [vmem:[%s15 + $0x8] sm:$0xff]
    %v1881 = vld [vmem:[%s15 + $0x10] sm:$0xff]
    %v1882 = vld [vmem:[%s15 + $0x18] sm:$0xff]
    %v1883 = vpack.c.bf16 %v1878, %v1877
    %v1884 = vpack.c.bf16 %v1880, %v1879
    %v1885 = vpack.c.bf16 %v1882, %v1881
    %v1886 = vld [vmem:[%s16] sm:$0x1]
    %v1888 = vlaneseq
    %v1889 = vshrl.u32 %v1888, 7
    %v1890 = vsub.s32 0, %v1889
    %v1891 = vrot.slane %v1886, %v1890
    %v1894 = vsel %vm198, %v1883, 0
    %1896 = vmatprep.subr.bf16.mxu0 0
    %1897 = vmatpush1.bf16.msra.mxu0 %v1884
    %1898 = vmatprep.subr.bf16.mxu0 0
    %1899 = vmatpush1.bf16.msra.mxu0 %v1885
    %1900 = vmatprep.subr.bf16.mxu0 0
    %1901 = vmatpush1.bf16.msra.mxu0 0
    %1902 = vmatprep.subr.bf16.mxu0 0
    %1903 = vmatpush1.bf16.msra.mxu0 0
    %1904 = vmatprep.subr.bf16.mxu0 0
    %1905 = vmatpush1.bf16.msra.mxu0 0
    %1906 = vmatprep.subr.bf16.mxu0 0
    %1907 = vmatpush1.bf16.msra.mxu0 0
    %1908 = vmatprep.subr.bf16.mxu0 0
    %1909 = vmatpush1.bf16.msra.mxu0 0
    %1910 = vmatprep.subr.bf16.mxu0 0
    %1911 = vmatpush1.bf16.msra.mxu0 0
    %1912 = vmatprep.subr.bf16.mxu0 0
    %1913 = vmatpush1.bf16.msra.mxu0 0
    %1914 = vmatprep.subr.bf16.mxu0 0
    %1915 = vmatpush1.bf16.msra.mxu0 0
    %1916 = vmatprep.subr.bf16.mxu0 0
    %1917 = vmatpush1.bf16.msra.mxu0 0
    %1918 = vmatprep.subr.bf16.mxu0 0
    %1919 = vmatpush1.bf16.msra.mxu0 0
    %1920 = vmatprep.subr.bf16.mxu0 0
    %1921 = vmatpush1.bf16.msra.mxu0 0
    %1922 = vmatprep.subr.bf16.mxu0 0
    %1923 = vmatpush1.bf16.msra.mxu0 0
    %1924 = vmatprep.subr.bf16.mxu0 0
    %1925 = vmatpush1.bf16.msra.mxu0 0
    %1926 = vmatprep.subr.bf16.mxu0 0
    %1927 = vmatpush1.bf16.msra.mxu0 0
    %1928 = vmatprep.mubr.bf16.mxu0 0
    %1929 = vmatmul.mubr.bf16.gmra.mrb[0].mxu0 %v1894
    %v1930 = vpop.f32.mrb[0].mxu0
    %v1931 = vadd.f32 %v1891, %v1930
    %v1932 = vpop.f32.mrb[0].mxu0
    %v1933 = vpop.f32.mrb[0].mxu0
    %v1934 = vadd.f32 %v1891, %v1933
    %v1935 = vpop.f32.mrb[0].mxu0
    %1936 = vdwg.mxu0
    %1937 = vst [vmem:[#allocation5] sm:$0xff] %v1931
    %1938 = vst [vmem:[#allocation5 + $0x8] sm:$0xff] %v1934
    // Predicated region
    $region74: #{encoder_with_head.1} parent=1 // pred_check
      _
    $region75: #{encoder_with_head.1} parent=1 // pred_check_branch
      %1940 = sbr.rel (0) target = $region77
    $region76: #{encoder_with_head.1} parent=1 // pred_region
      %s1942 = ssub.s32 256, 256
      %1943 = vsyncadd [#allocation4], %s1942
      %s1944 = sshll.u32 [#allocation5], 4
      %s1945 = int_to_ptr.vmem [resolvable:$true] %s1944
      %1950 = dma.vmem_to_hbm [thread:$0]  %s1945, 256, %s17, [#allocation4], 128, 128, 8
    $region77: #{encoder_with_head.1} parent=1 // pred_fallthru
      _
    // Predicated region
    $region78: #{encoder_with_head.1} parent=1 // pred_check
      _
    $region79: #{encoder_with_head.1} parent=1 // pred_check_branch
      %1952 = sbr.rel (0) target = $region81
    $region80: #{encoder_with_head.1} parent=1 // pred_region
      %1953 = dma.done [#allocation4], 256
    $region81: #{encoder_with_head.1} parent=1 // pred_fallthru
      _
    %1954 = vsyncpa [#allocation3], 1
    %1955 = vsyncpa [#allocation4], 1

</llo_original>
